<compile_context>
chip_gen: v5e
topology: v5e:2x2
jax: 0.10.0
libtpu: 0.0.40
codegen_flags: <defaults>
</compile_context>

<pallas_src>
import functools

import jax
import jax.numpy as jnp
from jax.experimental import pallas as pl
from jax.experimental.pallas import tpu as pltpu


def _window_attention_kernel(x_ref, wqkv_ref, bqkv_ref, bias_mask_ref,
                             wproj_ref, bproj_ref, o_ref, qkv_s, y_s,
                             *, num_heads, head_dim, windows_per_block):
    """One block of TB windows per grid step.

    x_ref        : (TB*Np, C)       rows already flattened in the wrapper
    wqkv_ref     : (C, 3C)          1/sqrt(hd) folded into the Q columns
    bqkv_ref     : (1, 3C)  f32     1/sqrt(hd) folded into the Q entries
    bias_mask_ref: (H, nWm, Np, Np) f32, rel-pos bias + attention mask
    wproj_ref    : (C, C)
    bproj_ref    : (1, C)   f32
    o_ref        : (TB*Np, C)
    qkv_s        : (TB*Np, 3C)      VMEM scratch, compute dtype
    y_s          : (TB*Np, C)       VMEM scratch, compute dtype (head concat)
    """
    R, C = x_ref.shape
    H, hd = num_heads, head_dim
    TB = windows_per_block
    Np = R // TB
    nWm = bias_mask_ref.shape[1]          # nW, or 1 when mask is None
    G = TB // nWm                         # window groups sharing one mask slice
    mxu_dtype = qkv_s.dtype

    # --- QKV projection: one (R, C) @ (C, 3C) MXU matmul, f32 accumulation ---
    qkv = jnp.dot(x_ref[...], wqkv_ref[...], preferred_element_type=jnp.float32)
    qkv = qkv + bqkv_ref[0]
    qkv_s[...] = qkv.astype(mxu_dtype)    # single whole-tensor cast

    # --- Per-head attention, end-to-end so live ranges stay bounded ----------
    for h in range(H):                    # small static unroll
        q = qkv_s[:, h * hd:(h + 1) * hd].reshape(TB, Np, hd)
        k = qkv_s[:, C + h * hd:C + (h + 1) * hd].reshape(TB, Np, hd)
        s = jnp.einsum('bnd,bmd->bnm', q, k,
                       preferred_element_type=jnp.float32)           # (TB,Np,Np)

        # rel-pos bias + mask: (nWm, Np, Np) broadcast over the G window groups
        s = (s.reshape(G, nWm, Np, Np)
             + bias_mask_ref[h][None]).reshape(TB, Np, Np)

        # Softmax over keys, kept unnormalized here (normalization folded into
        # the output below so the VPU multiply is over hd lanes, not Np).
        s = s - jnp.max(s, axis=-1, keepdims=True)
        p = jnp.exp(s)
        denom = jnp.sum(p, axis=-1, keepdims=True)                   # (TB,Np,1)

        v = qkv_s[:, 2 * C + h * hd:2 * C + (h + 1) * hd].reshape(TB, Np, hd)
        o_h = jnp.einsum('bnm,bmd->bnd', p.astype(mxu_dtype), v,
                         preferred_element_type=jnp.float32)         # (TB,Np,hd)
        o_h = o_h * pl.reciprocal(denom, approx=True)                # EUP slot
        y_s[:, h * hd:(h + 1) * hd] = o_h.reshape(R, hd).astype(mxu_dtype)

    # --- Output projection: ONE (R, C) @ (C, C) matmul (contraction depth C) --
    out = jnp.dot(y_s[...], wproj_ref[...], preferred_element_type=jnp.float32)
    out = out + bproj_ref[0]
    o_ref[...] = out.astype(o_ref.dtype)


def _choose_windows_per_block(B_, nW, Np, target_rows=512, min_blocks=4):
    """Pick TB = g*nW with g | (B_//nW) and TB*Np <= target_rows.

    Prefers a block count that is even and >= min_blocks (so both v7x
    TensorCores get >= 2 pipelined steps each); falls back gracefully for
    small batches.  Single-TC chips (v5e/v6e) simply get the largest block
    that still satisfies the preference chain.
    """
    B = B_ // nW
    divisors = [g for g in range(1, B + 1) if B % g == 0]
    fits = [g for g in divisors if g * nW * Np <= target_rows] or [1]
    preds = (
        lambda g: (B // g) >= min_blocks and (B // g) % 2 == 0,
        lambda g: (B // g) >= min_blocks,
        lambda g: (B // g) >= 2,
        lambda g: True,
    )
    for pred in preds:
        cands = [g for g in fits if pred(g)]
        if cands:
            return max(cands) * nW
    return nW


def window_attention(x, w_qkv, b_qkv, w_proj, b_proj, rel_bias, mask=None, *,
                     num_heads, compute_dtype=None, block_target_rows=512,
                     min_blocks=4):
    """Swin WindowAttention forward.

    x: (B_, N, C); w_qkv: (C, 3C); b_qkv: (3C,); w_proj: (C, C); b_proj: (C,);
    rel_bias: (H, N, N); mask: (nW, N, N) or None.

    compute_dtype=jnp.bfloat16 casts the MXU operands to bf16 (recommended for
    v6e/v7x; keep None on v5e); accumulation and softmax stay f32.
    Note: the softmax reciprocal uses the approximate EUP op (~1e-3 level
    perturbation vs. the PyTorch module).
    """
    B_, N, C = x.shape
    H = num_heads
    assert C % H == 0
    hd = C // H
    out_dtype = x.dtype
    scale = hd ** (-0.5)

    nW = 1 if mask is None else mask.shape[0]
    assert B_ % nW == 0

    # Pad the token axis to a multiple of 8 so (TB, Np) -> TB*Np row merges are
    # layout-free even for Swin's 7x7 windows (N=49).  Padded key columns are
    # masked; padded query rows are sliced off after the call.
    Np = ((N + 7) // 8) * 8
    pad = Np - N

    TB = _choose_windows_per_block(B_, nW, Np, target_rows=block_target_rows,
                                   min_blocks=min_blocks)
    # Every grid block starts at window index b*TB, a multiple of nW, so the
    # per-window mask pattern inside a block is static.
    assert B_ % TB == 0 and TB % nW == 0
    num_blocks = B_ // TB

    # Resident rel-pos bias + attention mask: (H, nW, Np, Np)  (nW=1 if no mask)
    rb = rel_bias.astype(jnp.float32)                          # (H, N, N)
    if mask is None:
        bm = rb[:, None, :, :]                                 # (H, 1, N, N)
    else:
        bm = rb[:, None, :, :] + mask.astype(jnp.float32)[None, :, :, :]
    if pad:
        bm = jnp.pad(bm, ((0, 0), (0, 0), (0, pad), (0, pad)))
        key_is_pad = jnp.arange(Np) >= N
        bm = jnp.where(key_is_pad[None, None, None, :], -1e9, bm)
    bm = jnp.asarray(bm, jnp.float32)
    nWm = bm.shape[1]

    # Fold the 1/sqrt(hd) scale into the Q columns of the QKV projection
    # (weight-side, one-time): softmax((q*s) @ k^T) == softmax(q @ (W_q*s) ...).
    col_scale = jnp.concatenate([jnp.full((C,), scale, jnp.float32),
                                 jnp.ones((2 * C,), jnp.float32)])
    w_qkv_f = w_qkv.astype(jnp.float32) * col_scale[None, :]
    b_qkv_f = (b_qkv.astype(jnp.float32) * col_scale).reshape(1, 3 * C)
    b_proj_f = b_proj.astype(jnp.float32).reshape(1, C)

    cdt = jnp.dtype(x.dtype) if compute_dtype is None else jnp.dtype(compute_dtype)
    x_p = jnp.pad(x, ((0, 0), (0, pad), (0, 0))) if pad else x
    x2 = x_p.reshape(B_ * Np, C).astype(cdt)        # lane-dense row slab
    w_qkv_in = w_qkv_f.astype(cdt)
    w_proj_in = w_proj.astype(cdt)

    kernel = functools.partial(_window_attention_kernel, num_heads=H,
                               head_dim=hd, windows_per_block=TB)

    # Advisory cost estimate for the XLA scheduler.
    flops = (2 * B_ * Np * C * 3 * C                 # qkv projection
             + 2 * B_ * H * Np * Np * hd * 2         # q@k^T and attn@v
             + 2 * B_ * Np * C * C)                  # output projection
    bytes_accessed = int(
        x2.size * x2.dtype.itemsize
        + B_ * Np * C * jnp.dtype(out_dtype).itemsize
        + w_qkv_in.size * w_qkv_in.dtype.itemsize
        + w_proj_in.size * w_proj_in.dtype.itemsize
        + bm.size * 4 + b_qkv_f.size * 4 + b_proj_f.size * 4)
    cost = pl.CostEstimate(flops=int(flops),
                           transcendentals=int(B_ * H * Np * Np),
                           bytes_accessed=bytes_accessed)

    grid_spec = pltpu.PrefetchScalarGridSpec(
        num_scalar_prefetch=0,
        grid=(num_blocks,),
        in_specs=[
            pl.BlockSpec((TB * Np, C), lambda b: (b, 0)),             # x rows
            pl.BlockSpec((C, 3 * C), lambda b: (0, 0)),               # w_qkv (resident)
            pl.BlockSpec((1, 3 * C), lambda b: (0, 0)),               # b_qkv
            pl.BlockSpec((H, nWm, Np, Np), lambda b: (0, 0, 0, 0)),   # bias+mask
            pl.BlockSpec((C, C), lambda b: (0, 0)),                   # w_proj
            pl.BlockSpec((1, C), lambda b: (0, 0)),                   # b_proj
        ],
        out_specs=pl.BlockSpec((TB * Np, C), lambda b: (b, 0)),
        scratch_shapes=[pltpu.VMEM((TB * Np, 3 * C), cdt),            # qkv
                        pltpu.VMEM((TB * Np, C), cdt)],               # head concat
    )

    out2 = pl.pallas_call(
        kernel,
        out_shape=jax.ShapeDtypeStruct((B_ * Np, C), out_dtype),
        grid_spec=grid_spec,
        compiler_params=pltpu.CompilerParams(dimension_semantics=("parallel",)),
        cost_estimate=cost,
    )(x2, w_qkv_in, b_qkv_f, bm, w_proj_in, b_proj_f)

    out = out2.reshape(B_, Np, C)
    return out[:, :N, :] if pad else out


def make_relative_position_bias(table, window_size, num_heads):
    """table: ((2Wh-1)*(2Ww-1), H) -> (H, N, N) bias (plain JAX glue)."""
    Wh, Ww = window_size
    coords_h = jnp.arange(Wh)
    coords_w = jnp.arange(Ww)
    coords = jnp.stack(jnp.meshgrid(coords_h, coords_w, indexing='ij'))   # (2,Wh,Ww)
    coords_flatten = coords.reshape(2, -1)                                # (2, N)
    rel = coords_flatten[:, :, None] - coords_flatten[:, None, :]         # (2, N, N)
    rel = rel.transpose(1, 2, 0)                                          # (N, N, 2)
    rel = rel.at[:, :, 0].add(Wh - 1)
    rel = rel.at[:, :, 1].add(Ww - 1)
    rel = rel.at[:, :, 0].multiply(2 * Ww - 1)
    rel_index = rel.sum(-1)                                               # (N, N)
    N = Wh * Ww
    bias = table[rel_index.reshape(-1)].reshape(N, N, num_heads)
    return bias.transpose(2, 0, 1).astype(jnp.float32)                    # (H, N, N)


def reference_window_attention(x, w_qkv, b_qkv, w_proj, b_proj, rel_bias, mask,
                               *, num_heads):
    """Pure-JAX reference mirroring the PyTorch forward."""
    B_, N, C = x.shape
    hd = C // num_heads
    scale = hd ** (-0.5)
    qkv = x @ w_qkv + b_qkv                                      # (B_, N, 3C)
    qkv = qkv.reshape(B_, N, 3, num_heads, hd).transpose(2, 0, 3, 1, 4)
    q, k, v = qkv[0], qkv[1], qkv[2]                             # (B_, H, N, hd)
    attn = jnp.einsum('bhnd,bhmd->bhnm', q * scale, k)
    attn = attn + rel_bias[None]
    if mask is not None:
        nW = mask.shape[0]
        attn = attn.reshape(B_ // nW, nW, num_heads, N, N) + mask[None, :, None]
        attn = attn.reshape(B_, num_heads, N, N)
    attn = jax.nn.softmax(attn, axis=-1)
    out = jnp.einsum('bhnm,bhmd->bhnd', attn, v)
    out = out.transpose(0, 2, 1, 3).reshape(B_, N, C)
    return out @ w_proj + b_proj


def _make_test_mask(nW, N):
    """Shifted-window style mask: block-diag 0 / off-block -100, odd windows."""
    grp = jnp.arange(N) // max(N // 2, 1)
    same = (grp[:, None] == grp[None, :]).astype(jnp.float32)
    base = (1.0 - same) * (-100.0)
    win_on = (jnp.arange(nW) % 2).astype(jnp.float32)
    return base[None] * win_on[:, None, None]                    # (nW, N, N)


if __name__ == "__main__":
    # Small shapes consistent with the module: dim=128 (lane-dense C), window
    # 4x4 -> N=16, num_heads=4 (head_dim=32), nW=4 windows/image, B=4 images.
    dim = 128
    window_size = (4, 4)
    num_heads = 4
    N = window_size[0] * window_size[1]
    nW = 4
    B = 4
    B_ = B * nW

    key = jax.random.PRNGKey(0)
    k_tab, k_wqkv, k_bqkv, k_wproj, k_bproj, k_x, k_tab2, k_x2 = \
        jax.random.split(key, 8)

    # Deterministic synthetic parameters (trunc_normal ~ normal*0.02 here).
    table = 0.02 * jax.random.normal(
        k_tab, ((2 * window_size[0] - 1) * (2 * window_size[1] - 1), num_heads),
        dtype=jnp.float32)
    # Linear weights stored as (in, out) so the kernel does x @ W + b.
    w_qkv = 0.02 * jax.random.normal(k_wqkv, (dim, 3 * dim), dtype=jnp.float32)
    b_qkv = 0.02 * jax.random.normal(k_bqkv, (3 * dim,), dtype=jnp.float32)
    w_proj = 0.02 * jax.random.normal(k_wproj, (dim, dim), dtype=jnp.float32)
    b_proj = 0.02 * jax.random.normal(k_bproj, (dim,), dtype=jnp.float32)

    x = jax.random.normal(k_x, (B_, N, dim), dtype=jnp.float32)
    mask = _make_test_mask(nW, N)
    rel_bias = make_relative_position_bias(table, window_size, num_heads)

    ref = reference_window_attention(x, w_qkv, b_qkv, w_proj, b_proj, rel_bias,
                                     mask, num_heads=num_heads)

    # --- f32 path (tolerance accounts for the approx EUP reciprocal) --------
    out = window_attention(x, w_qkv, b_qkv, w_proj, b_proj, rel_bias, mask,
                           num_heads=num_heads)
    out = jax.block_until_ready(out)
    assert out.shape == (B_, N, dim)
    assert jnp.allclose(out, ref, atol=2e-3, rtol=2e-3), "f32 mismatch vs reference"

    # --- bf16 MXU-operand path (v6e/v7x recommendation), f32 accumulation ---
    out_bf16 = window_attention(x, w_qkv, b_qkv, w_proj, b_proj, rel_bias, mask,
                                num_heads=num_heads, compute_dtype=jnp.bfloat16)
    out_bf16 = jax.block_until_ready(out_bf16)
    assert jnp.allclose(out_bf16, ref, atol=3e-2, rtol=3e-2), "bf16 mismatch vs reference"

    # --- mask=None path ------------------------------------------------------
    ref_nomask = reference_window_attention(x, w_qkv, b_qkv, w_proj, b_proj,
                                            rel_bias, None, num_heads=num_heads)
    out_nomask = window_attention(x, w_qkv, b_qkv, w_proj, b_proj, rel_bias,
                                  None, num_heads=num_heads)
    out_nomask = jax.block_until_ready(out_nomask)
    assert jnp.allclose(out_nomask, ref_nomask, atol=2e-3, rtol=2e-3), \
        "mask=None mismatch vs reference"

    # --- padded-N path (window 3x3 -> N=9, exercises the Swin 7x7-style pad) --
    ws2 = (3, 3)
    N2 = ws2[0] * ws2[1]
    table2 = 0.02 * jax.random.normal(
        k_tab2, ((2 * ws2[0] - 1) * (2 * ws2[1] - 1), num_heads), dtype=jnp.float32)
    x_small = jax.random.normal(k_x2, (B_, N2, dim), dtype=jnp.float32)
    mask2 = _make_test_mask(nW, N2)
    rel_bias2 = make_relative_position_bias(table2, ws2, num_heads)
    ref_pad = reference_window_attention(x_small, w_qkv, b_qkv, w_proj, b_proj,
                                         rel_bias2, mask2, num_heads=num_heads)
    out_pad = window_attention(x_small, w_qkv, b_qkv, w_proj, b_proj, rel_bias2,
                               mask2, num_heads=num_heads)
    out_pad = jax.block_until_ready(out_pad)
    assert out_pad.shape == (B_, N2, dim)
    assert jnp.allclose(out_pad, ref_pad, atol=2e-3, rtol=2e-3), \
        "padded-N mismatch vs reference"

    print("KERNEL_OK")
</pallas_src>

<mosaic_0001>
module attributes {stable_mosaic.version = 11 : i64} {
  func.func @_window_attention_kernel(%arg0: i32, %arg1: memref<64x128xf32, #tpu.memory_space<vmem>>, %arg2: memref<128x384xf32, #tpu.memory_space<vmem>>, %arg3: memref<1x384xf32, #tpu.memory_space<vmem>>, %arg4: memref<4x4x16x16xf32, #tpu.memory_space<vmem>>, %arg5: memref<128x128xf32, #tpu.memory_space<vmem>>, %arg6: memref<1x128xf32, #tpu.memory_space<vmem>>, %arg7: memref<64x128xf32, #tpu.memory_space<vmem>>, %arg8: memref<64x384xf32, #tpu.memory_space<vmem>>, %arg9: memref<64x128xf32, #tpu.memory_space<vmem>>) attributes {dimension_semantics = [#tpu.dimension_semantics<parallel>], iteration_bounds = array<i64: 4>, scalar_prefetch = 0 : i64, scratch_operands = 2 : i64, tpu.core_type = #tpu.core_type<tc>, window_params = [{transform_indices = @transform_0, window_bounds = array<i64: 64, 128>}, {pipeline_mode = #tpu.pipeline_mode<synchronous>, transform_indices = @transform_1, window_bounds = array<i64: 128, 384>}, {pipeline_mode = #tpu.pipeline_mode<synchronous>, transform_indices = @transform_2, window_bounds = array<i64: 1, 384>}, {pipeline_mode = #tpu.pipeline_mode<synchronous>, transform_indices = @transform_3, window_bounds = array<i64: 4, 4, 16, 16>}, {pipeline_mode = #tpu.pipeline_mode<synchronous>, transform_indices = @transform_4, window_bounds = array<i64: 128, 128>}, {pipeline_mode = #tpu.pipeline_mode<synchronous>, transform_indices = @transform_5, window_bounds = array<i64: 1, 128>}, {transform_indices = @transform_6, window_bounds = array<i64: 64, 128>}]} {
    %c0 = arith.constant 0 : index
    %c0_0 = arith.constant 0 : index
    %0 = vector.load %arg1[%c0, %c0_0] : memref<64x128xf32, #tpu.memory_space<vmem>>, vector<64x128xf32>
    %c0_1 = arith.constant 0 : index
    %c0_2 = arith.constant 0 : index
    %1 = vector.load %arg2[%c0_1, %c0_2] : memref<128x384xf32, #tpu.memory_space<vmem>>, vector<128x384xf32>
    %cst = arith.constant dense<0.000000e+00> : vector<64x384xf32>
    %2 = tpu.matmul %0, %1, %cst {dimension_numbers = #tpu.dot_dimension_numbers<[1], [0], [0], [1], [0, 0, 1, 1], [], []>} : vector<64x128xf32>, vector<128x384xf32>, vector<64x384xf32> -> vector<64x384xf32>
    %c0_3 = arith.constant 0 : index
    %c0_4 = arith.constant 0 : index
    %3 = vector.load %arg3[%c0_3, %c0_4] : memref<1x384xf32, #tpu.memory_space<vmem>>, vector<1x384xf32>
    %4 = vector.shape_cast %3 : vector<1x384xf32> to vector<384xf32>
    %5 = vector.shape_cast %4 : vector<384xf32> to vector<1x384xf32>
    %6 = vector.broadcast %5 : vector<1x384xf32> to vector<64x384xf32>
    %7 = arith.addf %2, %6 : vector<64x384xf32>
    %c0_5 = arith.constant 0 : index
    %c0_6 = arith.constant 0 : index
    %8 = vector.load %arg8[%c0_5, %c0_6] : memref<64x384xf32, #tpu.memory_space<vmem>>, vector<64x384xf32>
    tpu.vector_store %arg8[%c0_5, %c0_6], %7 {strides = array<i32>} : memref<64x384xf32, #tpu.memory_space<vmem>>, vector<64x384xf32>,
    %c0_7 = arith.constant 0 : index
    %c0_8 = arith.constant 0 : index
    %9 = vector.load %arg8[%c0_7, %c0_8] : memref<64x384xf32, #tpu.memory_space<vmem>>, vector<64x32xf32>
    %10 = vector.shape_cast %9 : vector<64x32xf32> to vector<4x16x32xf32>
    %c0_9 = arith.constant 0 : index
    %c128 = arith.constant 128 : index
    %11 = vector.load %arg8[%c0_9, %c128] : memref<64x384xf32, #tpu.memory_space<vmem>>, vector<64x32xf32>
    %12 = vector.shape_cast %11 : vector<64x32xf32> to vector<4x16x32xf32>
    "tpu.trace_start"() <{level = 10 : i32, message = "bnd,bmd->bnm"}> : () -> ()
    %cst_10 = arith.constant dense<0.000000e+00> : vector<4x16x16xf32>
    %13 = tpu.matmul %10, %12, %cst_10 {dimension_numbers = #tpu.dot_dimension_numbers<[2], [2], [1], [1], [0, 0, 0, 1, 1, 1], [0], [0]>} : vector<4x16x32xf32>, vector<4x16x32xf32>, vector<4x16x16xf32> -> vector<4x16x16xf32>
    "tpu.trace_stop"() : () -> ()
    %14 = vector.shape_cast %13 : vector<4x16x16xf32> to vector<1x4x16x16xf32>
    %c0_11 = arith.constant 0 : index
    %c0_12 = arith.constant 0 : index
    %c0_13 = arith.constant 0 : index
    %c0_14 = arith.constant 0 : index
    %15 = vector.load %arg4[%c0_11, %c0_12, %c0_13, %c0_14] : memref<4x4x16x16xf32, #tpu.memory_space<vmem>>, vector<1x4x16x16xf32>
    %16 = vector.shape_cast %15 : vector<1x4x16x16xf32> to vector<4x16x16xf32>
    %17 = vector.shape_cast %16 : vector<4x16x16xf32> to vector<1x4x16x16xf32>
    %18 = arith.addf %14, %17 : vector<1x4x16x16xf32>
    %19 = vector.shape_cast %18 : vector<1x4x16x16xf32> to vector<4x16x16xf32>
    %cst_15 = arith.constant dense<0xFF800000> : vector<4x16xf32>
    %20 = vector.multi_reduction <maximumf>, %19, %cst_15 [2] : vector<4x16x16xf32> to vector<4x16xf32>
    %21 = vector.shape_cast %20 : vector<4x16xf32> to vector<4x16x1xf32>
    %22 = vector.broadcast %21 : vector<4x16x1xf32> to vector<4x16x16xf32>
    %23 = arith.subf %19, %22 : vector<4x16x16xf32>
    %24 = math.exp %23 : vector<4x16x16xf32>
    %cst_16 = arith.constant dense<0.000000e+00> : vector<4x16xf32>
    %25 = vector.multi_reduction <add>, %24, %cst_16 [2] : vector<4x16x16xf32> to vector<4x16xf32>
    %26 = vector.shape_cast %25 : vector<4x16xf32> to vector<4x16x1xf32>
    %c0_17 = arith.constant 0 : index
    %c256 = arith.constant 256 : index
    %27 = vector.load %arg8[%c0_17, %c256] : memref<64x384xf32, #tpu.memory_space<vmem>>, vector<64x32xf32>
    %28 = vector.shape_cast %27 : vector<64x32xf32> to vector<4x16x32xf32>
    "tpu.trace_start"() <{level = 10 : i32, message = "bnm,bmd->bnd"}> : () -> ()
    %cst_18 = arith.constant dense<0.000000e+00> : vector<4x16x32xf32>
    %29 = tpu.matmul %24, %28, %cst_18 {dimension_numbers = #tpu.dot_dimension_numbers<[2], [1], [1], [2], [0, 0, 0, 1, 1, 2], [0], [0]>} : vector<4x16x16xf32>, vector<4x16x32xf32>, vector<4x16x32xf32> -> vector<4x16x32xf32>
    "tpu.trace_stop"() : () -> ()
    %30 = tpu.reciprocal %26 {approx = true} : vector<4x16x1xf32> -> vector<4x16x1xf32>
    %31 = vector.broadcast %30 : vector<4x16x1xf32> to vector<4x16x32xf32>
    %32 = arith.mulf %29, %31 : vector<4x16x32xf32>
    %33 = vector.shape_cast %32 : vector<4x16x32xf32> to vector<64x32xf32>
    %c0_19 = arith.constant 0 : index
    %c0_20 = arith.constant 0 : index
    %34 = vector.load %arg9[%c0_19, %c0_20] : memref<64x128xf32, #tpu.memory_space<vmem>>, vector<64x32xf32>
    tpu.vector_store %arg9[%c0_19, %c0_20], %33 {strides = array<i32>} : memref<64x128xf32, #tpu.memory_space<vmem>>, vector<64x32xf32>,
    %c0_21 = arith.constant 0 : index
    %c32 = arith.constant 32 : index
    %35 = vector.load %arg8[%c0_21, %c32] : memref<64x384xf32, #tpu.memory_space<vmem>>, vector<64x32xf32>
    %36 = vector.shape_cast %35 : vector<64x32xf32> to vector<4x16x32xf32>
    %c0_22 = arith.constant 0 : index
    %c160 = arith.constant 160 : index
    %37 = vector.load %arg8[%c0_22, %c160] : memref<64x384xf32, #tpu.memory_space<vmem>>, vector<64x32xf32>
    %38 = vector.shape_cast %37 : vector<64x32xf32> to vector<4x16x32xf32>
    "tpu.trace_start"() <{level = 10 : i32, message = "bnd,bmd->bnm"}> : () -> ()
    %cst_23 = arith.constant dense<0.000000e+00> : vector<4x16x16xf32>
    %39 = tpu.matmul %36, %38, %cst_23 {dimension_numbers = #tpu.dot_dimension_numbers<[2], [2], [1], [1], [0, 0, 0, 1, 1, 1], [0], [0]>} : vector<4x16x32xf32>, vector<4x16x32xf32>, vector<4x16x16xf32> -> vector<4x16x16xf32>
    "tpu.trace_stop"() : () -> ()
    %40 = vector.shape_cast %39 : vector<4x16x16xf32> to vector<1x4x16x16xf32>
    %c1 = arith.constant 1 : index
    %c0_24 = arith.constant 0 : index
    %c0_25 = arith.constant 0 : index
    %c0_26 = arith.constant 0 : index
    %41 = vector.load %arg4[%c1, %c0_24, %c0_25, %c0_26] : memref<4x4x16x16xf32, #tpu.memory_space<vmem>>, vector<1x4x16x16xf32>
    %42 = vector.shape_cast %41 : vector<1x4x16x16xf32> to vector<4x16x16xf32>
    %43 = vector.shape_cast %42 : vector<4x16x16xf32> to vector<1x4x16x16xf32>
    %44 = arith.addf %40, %43 : vector<1x4x16x16xf32>
    %45 = vector.shape_cast %44 : vector<1x4x16x16xf32> to vector<4x16x16xf32>
    %cst_27 = arith.constant dense<0xFF800000> : vector<4x16xf32>
    %46 = vector.multi_reduction <maximumf>, %45, %cst_27 [2] : vector<4x16x16xf32> to vector<4x16xf32>
    %47 = vector.shape_cast %46 : vector<4x16xf32> to vector<4x16x1xf32>
    %48 = vector.broadcast %47 : vector<4x16x1xf32> to vector<4x16x16xf32>
    %49 = arith.subf %45, %48 : vector<4x16x16xf32>
    %50 = math.exp %49 : vector<4x16x16xf32>
    %cst_28 = arith.constant dense<0.000000e+00> : vector<4x16xf32>
    %51 = vector.multi_reduction <add>, %50, %cst_28 [2] : vector<4x16x16xf32> to vector<4x16xf32>
    %52 = vector.shape_cast %51 : vector<4x16xf32> to vector<4x16x1xf32>
    %c0_29 = arith.constant 0 : index
    %c288 = arith.constant 288 : index
    %53 = vector.load %arg8[%c0_29, %c288] : memref<64x384xf32, #tpu.memory_space<vmem>>, vector<64x32xf32>
    %54 = vector.shape_cast %53 : vector<64x32xf32> to vector<4x16x32xf32>
    "tpu.trace_start"() <{level = 10 : i32, message = "bnm,bmd->bnd"}> : () -> ()
    %cst_30 = arith.constant dense<0.000000e+00> : vector<4x16x32xf32>
    %55 = tpu.matmul %50, %54, %cst_30 {dimension_numbers = #tpu.dot_dimension_numbers<[2], [1], [1], [2], [0, 0, 0, 1, 1, 2], [0], [0]>} : vector<4x16x16xf32>, vector<4x16x32xf32>, vector<4x16x32xf32> -> vector<4x16x32xf32>
    "tpu.trace_stop"() : () -> ()
    %56 = tpu.reciprocal %52 {approx = true} : vector<4x16x1xf32> -> vector<4x16x1xf32>
    %57 = vector.broadcast %56 : vector<4x16x1xf32> to vector<4x16x32xf32>
    %58 = arith.mulf %55, %57 : vector<4x16x32xf32>
    %59 = vector.shape_cast %58 : vector<4x16x32xf32> to vector<64x32xf32>
    %c0_31 = arith.constant 0 : index
    %c32_32 = arith.constant 32 : index
    %60 = vector.load %arg9[%c0_31, %c32_32] : memref<64x128xf32, #tpu.memory_space<vmem>>, vector<64x32xf32>
    tpu.vector_store %arg9[%c0_31, %c32_32], %59 {strides = array<i32>} : memref<64x128xf32, #tpu.memory_space<vmem>>, vector<64x32xf32>,
    %c0_33 = arith.constant 0 : index
    %c64 = arith.constant 64 : index
    %61 = vector.load %arg8[%c0_33, %c64] : memref<64x384xf32, #tpu.memory_space<vmem>>, vector<64x32xf32>
    %62 = vector.shape_cast %61 : vector<64x32xf32> to vector<4x16x32xf32>
    %c0_34 = arith.constant 0 : index
    %c192 = arith.constant 192 : index
    %63 = vector.load %arg8[%c0_34, %c192] : memref<64x384xf32, #tpu.memory_space<vmem>>, vector<64x32xf32>
    %64 = vector.shape_cast %63 : vector<64x32xf32> to vector<4x16x32xf32>
    "tpu.trace_start"() <{level = 10 : i32, message = "bnd,bmd->bnm"}> : () -> ()
    %cst_35 = arith.constant dense<0.000000e+00> : vector<4x16x16xf32>
    %65 = tpu.matmul %62, %64, %cst_35 {dimension_numbers = #tpu.dot_dimension_numbers<[2], [2], [1], [1], [0, 0, 0, 1, 1, 1], [0], [0]>} : vector<4x16x32xf32>, vector<4x16x32xf32>, vector<4x16x16xf32> -> vector<4x16x16xf32>
    "tpu.trace_stop"() : () -> ()
    %66 = vector.shape_cast %65 : vector<4x16x16xf32> to vector<1x4x16x16xf32>
    %c2 = arith.constant 2 : index
    %c0_36 = arith.constant 0 : index
    %c0_37 = arith.constant 0 : index
    %c0_38 = arith.constant 0 : index
    %67 = vector.load %arg4[%c2, %c0_36, %c0_37, %c0_38] : memref<4x4x16x16xf32, #tpu.memory_space<vmem>>, vector<1x4x16x16xf32>
    %68 = vector.shape_cast %67 : vector<1x4x16x16xf32> to vector<4x16x16xf32>
    %69 = vector.shape_cast %68 : vector<4x16x16xf32> to vector<1x4x16x16xf32>
    %70 = arith.addf %66, %69 : vector<1x4x16x16xf32>
    %71 = vector.shape_cast %70 : vector<1x4x16x16xf32> to vector<4x16x16xf32>
    %cst_39 = arith.constant dense<0xFF800000> : vector<4x16xf32>
    %72 = vector.multi_reduction <maximumf>, %71, %cst_39 [2] : vector<4x16x16xf32> to vector<4x16xf32>
    %73 = vector.shape_cast %72 : vector<4x16xf32> to vector<4x16x1xf32>
    %74 = vector.broadcast %73 : vector<4x16x1xf32> to vector<4x16x16xf32>
    %75 = arith.subf %71, %74 : vector<4x16x16xf32>
    %76 = math.exp %75 : vector<4x16x16xf32>
    %cst_40 = arith.constant dense<0.000000e+00> : vector<4x16xf32>
    %77 = vector.multi_reduction <add>, %76, %cst_40 [2] : vector<4x16x16xf32> to vector<4x16xf32>
    %78 = vector.shape_cast %77 : vector<4x16xf32> to vector<4x16x1xf32>
    %c0_41 = arith.constant 0 : index
    %c320 = arith.constant 320 : index
    %79 = vector.load %arg8[%c0_41, %c320] : memref<64x384xf32, #tpu.memory_space<vmem>>, vector<64x32xf32>
    %80 = vector.shape_cast %79 : vector<64x32xf32> to vector<4x16x32xf32>
    "tpu.trace_start"() <{level = 10 : i32, message = "bnm,bmd->bnd"}> : () -> ()
    %cst_42 = arith.constant dense<0.000000e+00> : vector<4x16x32xf32>
    %81 = tpu.matmul %76, %80, %cst_42 {dimension_numbers = #tpu.dot_dimension_numbers<[2], [1], [1], [2], [0, 0, 0, 1, 1, 2], [0], [0]>} : vector<4x16x16xf32>, vector<4x16x32xf32>, vector<4x16x32xf32> -> vector<4x16x32xf32>
    "tpu.trace_stop"() : () -> ()
    %82 = tpu.reciprocal %78 {approx = true} : vector<4x16x1xf32> -> vector<4x16x1xf32>
    %83 = vector.broadcast %82 : vector<4x16x1xf32> to vector<4x16x32xf32>
    %84 = arith.mulf %81, %83 : vector<4x16x32xf32>
    %85 = vector.shape_cast %84 : vector<4x16x32xf32> to vector<64x32xf32>
    %c0_43 = arith.constant 0 : index
    %c64_44 = arith.constant 64 : index
    %86 = vector.load %arg9[%c0_43, %c64_44] : memref<64x128xf32, #tpu.memory_space<vmem>>, vector<64x32xf32>
    tpu.vector_store %arg9[%c0_43, %c64_44], %85 {strides = array<i32>} : memref<64x128xf32, #tpu.memory_space<vmem>>, vector<64x32xf32>,
    %c0_45 = arith.constant 0 : index
    %c96 = arith.constant 96 : index
    %87 = vector.load %arg8[%c0_45, %c96] : memref<64x384xf32, #tpu.memory_space<vmem>>, vector<64x32xf32>
    %88 = vector.shape_cast %87 : vector<64x32xf32> to vector<4x16x32xf32>
    %c0_46 = arith.constant 0 : index
    %c224 = arith.constant 224 : index
    %89 = vector.load %arg8[%c0_46, %c224] : memref<64x384xf32, #tpu.memory_space<vmem>>, vector<64x32xf32>
    %90 = vector.shape_cast %89 : vector<64x32xf32> to vector<4x16x32xf32>
    "tpu.trace_start"() <{level = 10 : i32, message = "bnd,bmd->bnm"}> : () -> ()
    %cst_47 = arith.constant dense<0.000000e+00> : vector<4x16x16xf32>
    %91 = tpu.matmul %88, %90, %cst_47 {dimension_numbers = #tpu.dot_dimension_numbers<[2], [2], [1], [1], [0, 0, 0, 1, 1, 1], [0], [0]>} : vector<4x16x32xf32>, vector<4x16x32xf32>, vector<4x16x16xf32> -> vector<4x16x16xf32>
    "tpu.trace_stop"() : () -> ()
    %92 = vector.shape_cast %91 : vector<4x16x16xf32> to vector<1x4x16x16xf32>
    %c3 = arith.constant 3 : index
    %c0_48 = arith.constant 0 : index
    %c0_49 = arith.constant 0 : index
    %c0_50 = arith.constant 0 : index
    %93 = vector.load %arg4[%c3, %c0_48, %c0_49, %c0_50] : memref<4x4x16x16xf32, #tpu.memory_space<vmem>>, vector<1x4x16x16xf32>
    %94 = vector.shape_cast %93 : vector<1x4x16x16xf32> to vector<4x16x16xf32>
    %95 = vector.shape_cast %94 : vector<4x16x16xf32> to vector<1x4x16x16xf32>
    %96 = arith.addf %92, %95 : vector<1x4x16x16xf32>
    %97 = vector.shape_cast %96 : vector<1x4x16x16xf32> to vector<4x16x16xf32>
    %cst_51 = arith.constant dense<0xFF800000> : vector<4x16xf32>
    %98 = vector.multi_reduction <maximumf>, %97, %cst_51 [2] : vector<4x16x16xf32> to vector<4x16xf32>
    %99 = vector.shape_cast %98 : vector<4x16xf32> to vector<4x16x1xf32>
    %100 = vector.broadcast %99 : vector<4x16x1xf32> to vector<4x16x16xf32>
    %101 = arith.subf %97, %100 : vector<4x16x16xf32>
    %102 = math.exp %101 : vector<4x16x16xf32>
    %cst_52 = arith.constant dense<0.000000e+00> : vector<4x16xf32>
    %103 = vector.multi_reduction <add>, %102, %cst_52 [2] : vector<4x16x16xf32> to vector<4x16xf32>
    %104 = vector.shape_cast %103 : vector<4x16xf32> to vector<4x16x1xf32>
    %c0_53 = arith.constant 0 : index
    %c352 = arith.constant 352 : index
    %105 = vector.load %arg8[%c0_53, %c352] : memref<64x384xf32, #tpu.memory_space<vmem>>, vector<64x32xf32>
    %106 = vector.shape_cast %105 : vector<64x32xf32> to vector<4x16x32xf32>
    "tpu.trace_start"() <{level = 10 : i32, message = "bnm,bmd->bnd"}> : () -> ()
    %cst_54 = arith.constant dense<0.000000e+00> : vector<4x16x32xf32>
    %107 = tpu.matmul %102, %106, %cst_54 {dimension_numbers = #tpu.dot_dimension_numbers<[2], [1], [1], [2], [0, 0, 0, 1, 1, 2], [0], [0]>} : vector<4x16x16xf32>, vector<4x16x32xf32>, vector<4x16x32xf32> -> vector<4x16x32xf32>
    "tpu.trace_stop"() : () -> ()
    %108 = tpu.reciprocal %104 {approx = true} : vector<4x16x1xf32> -> vector<4x16x1xf32>
    %109 = vector.broadcast %108 : vector<4x16x1xf32> to vector<4x16x32xf32>
    %110 = arith.mulf %107, %109 : vector<4x16x32xf32>
    %111 = vector.shape_cast %110 : vector<4x16x32xf32> to vector<64x32xf32>
    %c0_55 = arith.constant 0 : index
    %c96_56 = arith.constant 96 : index
    %112 = vector.load %arg9[%c0_55, %c96_56] : memref<64x128xf32, #tpu.memory_space<vmem>>, vector<64x32xf32>
    tpu.vector_store %arg9[%c0_55, %c96_56], %111 {strides = array<i32>} : memref<64x128xf32, #tpu.memory_space<vmem>>, vector<64x32xf32>,
    %c0_57 = arith.constant 0 : index
    %c0_58 = arith.constant 0 : index
    %113 = vector.load %arg9[%c0_57, %c0_58] : memref<64x128xf32, #tpu.memory_space<vmem>>, vector<64x128xf32>
    %c0_59 = arith.constant 0 : index
    %c0_60 = arith.constant 0 : index
    %114 = vector.load %arg5[%c0_59, %c0_60] : memref<128x128xf32, #tpu.memory_space<vmem>>, vector<128x128xf32>
    %cst_61 = arith.constant dense<0.000000e+00> : vector<64x128xf32>
    %115 = tpu.matmul %113, %114, %cst_61 {dimension_numbers = #tpu.dot_dimension_numbers<[1], [0], [0], [1], [0, 0, 1, 1], [], []>} : vector<64x128xf32>, vector<128x128xf32>, vector<64x128xf32> -> vector<64x128xf32>
    %c0_62 = arith.constant 0 : index
    %c0_63 = arith.constant 0 : index
    %116 = vector.load %arg6[%c0_62, %c0_63] : memref<1x128xf32, #tpu.memory_space<vmem>>, vector<1x128xf32>
    %117 = vector.shape_cast %116 : vector<1x128xf32> to vector<128xf32>
    %118 = vector.shape_cast %117 : vector<128xf32> to vector<1x128xf32>
    %119 = vector.broadcast %118 : vector<1x128xf32> to vector<64x128xf32>
    %120 = arith.addf %115, %119 : vector<64x128xf32>
    %c0_64 = arith.constant 0 : index
    %c0_65 = arith.constant 0 : index
    %121 = vector.load %arg7[%c0_64, %c0_65] : memref<64x128xf32, #tpu.memory_space<vmem>>, vector<64x128xf32>
    tpu.vector_store %arg7[%c0_64, %c0_65], %120 {strides = array<i32>} : memref<64x128xf32, #tpu.memory_space<vmem>>, vector<64x128xf32>,
    return
  }
  func.func @transform_0(%arg0: i32) -> (i32, i32) {
    %c0_i32 = arith.constant 0 : i32
    %c0_i32_0 = arith.constant 0 : i32
    return %arg0, %c0_i32 : i32, i32
  }
  func.func @transform_1(%arg0: i32) -> (i32, i32) {
    %c0_i32 = arith.constant 0 : i32
    %c0_i32_0 = arith.constant 0 : i32
    %c0_i32_1 = arith.constant 0 : i32
    return %c0_i32, %c0_i32_0 : i32, i32
  }
  func.func @transform_2(%arg0: i32) -> (i32, i32) {
    %c0_i32 = arith.constant 0 : i32
    %c0_i32_0 = arith.constant 0 : i32
    %c0_i32_1 = arith.constant 0 : i32
    return %c0_i32, %c0_i32_0 : i32, i32
  }
  func.func @transform_3(%arg0: i32) -> (i32, i32, i32, i32) {
    %c0_i32 = arith.constant 0 : i32
    %c0_i32_0 = arith.constant 0 : i32
    %c0_i32_1 = arith.constant 0 : i32
    %c0_i32_2 = arith.constant 0 : i32
    %c0_i32_3 = arith.constant 0 : i32
    return %c0_i32, %c0_i32_0, %c0_i32_1, %c0_i32_2 : i32, i32, i32, i32
  }
  func.func @transform_4(%arg0: i32) -> (i32, i32) {
    %c0_i32 = arith.constant 0 : i32
    %c0_i32_0 = arith.constant 0 : i32
    %c0_i32_1 = arith.constant 0 : i32
    return %c0_i32, %c0_i32_0 : i32, i32
  }
  func.func @transform_5(%arg0: i32) -> (i32, i32) {
    %c0_i32 = arith.constant 0 : i32
    %c0_i32_0 = arith.constant 0 : i32
    %c0_i32_1 = arith.constant 0 : i32
    return %c0_i32, %c0_i32_0 : i32, i32
  }
  func.func @transform_6(%arg0: i32) -> (i32, i32) {
    %c0_i32 = arith.constant 0 : i32
    %c0_i32_0 = arith.constant 0 : i32
    return %arg0, %c0_i32 : i32, i32
  }
}

</mosaic_0001>

<llo_original>
// kernel: tpu_custom_call.1
$region0: #{tpu_custom_call.1}
  #allocation0 [shape = 'u32[]', space=smem, size = 0x4, offset = 0x4, fixed_abs, tag = 'smem constant byte address 0x4 - core index']
  #allocation1 [shape = 'u32[72,128]{1,0:T(1,128)}', space=vmem, size = 0x9000, scoped, tag = 'internal scratch']
  #allocation2 [shape = 'f32[64,384]{1,0:T(8,128)}', space=vmem, size = 0x18000, scoped, tag = 'scratch operand']
  #allocation3 [shape = 'f32[64,128]{1,0:T(8,128)}', space=vmem, size = 0x8000, scoped, tag = 'scratch operand']
  %s0 = inlined_call_operand.hbm [shape: f32[256,128], index: 0, kind: input, shape index: {}]
  %s1 = inlined_call_operand.hbm [shape: f32[128,384], index: 1, kind: input, shape index: {}]
  %s2 = inlined_call_operand.hbm [shape: f32[1,384], index: 2, kind: input, shape index: {}]
  %s3 = inlined_call_operand.hbm [shape: f32[4,4,16,16], index: 3, kind: input, shape index: {}]
  %s4 = inlined_call_operand.hbm [shape: f32[128,128], index: 4, kind: input, shape index: {}]
  %s5 = inlined_call_operand.vmem [shape: f32[1,128], index: 5, kind: input, shape index: {}]
  %s6 = inlined_call_operand.hbm [shape: f32[256,128], index: 6, kind: output, shape index: {}]
  %s7 = sld [smem:[#allocation0]]
  $region77: #{tpu_custom_call.1} parent=0
    _
  %s9 = ssub.s32 1, %s7
  %s10 = scalar_select 0, %s9, %s7
  $region1: #{tpu_custom_call.1} parent=0
    #allocation4 [shape = 'u8[65536]{0}', space=vmem, size = 0x10000, scoped, tag = 'input window, operand 0']
    #allocation5 [shape = 's32[2]{0}', space=sflag, size = 0x8, scoped, tag = 'scoped memory for tpu_custom_call.1']
    #allocation6 [shape = 's32[2]{0}', space=sflag, size = 0x8, scoped, tag = 'scoped memory for tpu_custom_call.1']
    #allocation7 [shape = 'u8[196608]{0}', space=vmem, size = 0x30000, scoped, tag = 'input window, operand 1, single buffered']
    #allocation8 [shape = 's32[1]{0}', space=sflag, size = 0x4, scoped, tag = 'scoped memory for tpu_custom_call.1']
    #allocation9 [shape = 'u8[1536]{0}', space=vmem, size = 0x800, scoped, tag = 'input window, operand 2, single buffered']
    #allocation10 [shape = 'u8[131072]{0}', space=vmem, size = 0x20000, scoped, tag = 'input window, operand 3, single buffered']
    #allocation11 [shape = 's32[1]{0}', space=sflag, size = 0x4, scoped, tag = 'scoped memory for tpu_custom_call.1']
    #allocation12 [shape = 'u8[65536]{0}', space=vmem, size = 0x10000, scoped, tag = 'input window, operand 4, single buffered']
    #allocation13 [shape = 'u8[65536]{0}', space=vmem, size = 0x10000, scoped, tag = 'output window, operand 0']
    %11 = vsyncpa [#allocation5], 0
    %s12 = scalar_lea.sflag [#allocation5], 1
    %13 = vsyncpa %s12, 0
    %14 = vsyncpa [#allocation8], 0
    %15 = vsyncpa [#allocation11], 0
    %16 = vsyncpa [#allocation6], 0
    %s17 = scalar_lea.sflag [#allocation6], 1
    %18 = vsyncpa %s17, 0
    loop: start=0, step=1, limit=6
    $region2: #{tpu_custom_call.1} parent=1 // loop_pre_header
      _
    $region3: #{tpu_custom_call.1} parent=1 // loop_header
      %s20 = sphi 0, %s24
      %p21 = scmp.ge.s32.totalorder %s20, 6
      %s30 = sphi 0, %s32
      %s33 = sphi 0, %s30
      %s34 = sphi 0, %s33
      %s50 = sphi 0, %s34
      %s54 = sphi 0, %s54
      %s56 = sphi 0, %s54
      %s57 = sphi 0, %s56
      %s71 = sphi 0, %s57
      %s75 = sphi 0, %s75
      %s77 = sphi 0, %s75
      %s78 = sphi 0, %s77
      %s92 = sphi 0, %s78
      %s96 = sphi 0, %s96
      %s98 = sphi 0, %s96
      %s99 = sphi 0, %s98
      %s113 = sphi 0, %s99
      %s117 = sphi 0, %s117
      %s119 = sphi 0, %s117
      %s120 = sphi 0, %s119
      %s134 = sphi 0, %s120
      %s138 = sphi 0, %s138
      %s140 = sphi 0, %s138
      %s141 = sphi 0, %s140
      %s155 = sphi 0, %s141
      %s161 = sphi 0, %s163
      %s164 = sphi 0, %s161
      %s165 = sphi 0, %s164
      %s181 = sphi 0, %s165
    $region4: #{tpu_custom_call.1} parent=1 // loop_header_branch
      %23 = sbr.rel (%p21) target = $region8
    $region5: #{tpu_custom_call.1} parent=1 // loop_body
      %s25 = ssub.s32 %s20, 1
      %s26 = ssub.s32 %s20, 2
      %s27 = sadd.s32 %s20, 1
      %s28 = ssub.s32 %s20, %s27
      %p29 = scmp.eq.s32.totalorder %s28, 0
      %s31 = sadd.s32 %s30, 1
      %s32 = scalar_select %p29, %s30, %s31
      %p35 = pneg %p29
      %p36 = scmp.eq.s32.totalorder %s20, 3
      %p37 = por %p35, %p36
      %p38 = scmp.ne.s32.totalorder %s30, %s33
      %p39 = scmp.eq.s32.totalorder %s20, 0
      %p40 = por %p38, %p39
      %p41 = scmp.ne.s32.totalorder %s30, %s33
      %p42 = scmp.eq.s32.totalorder %s25, 3
      %p43 = por %p41, %p42
      %p44 = scmp.ne.s32.totalorder %s33, %s34
      %p45 = scmp.eq.s32.totalorder %s25, 0
      %p46 = por %p44, %p45
      %p47 = scmp.ne.s32.totalorder %s33, %s34
      %p48 = scmp.eq.s32.totalorder %s26, 3
      %p49 = por %p47, %p48
      %p51 = scmp.ne.s32.totalorder %s34, %s50
      %p52 = scmp.eq.s32.totalorder %s26, 0
      %p53 = por %p51, %p52
      %s55 = sadd.s32 %s54, 1
      %p58 = scmp.eq.s32.totalorder %s20, 3
      %p59 = scmp.ne.s32.totalorder %s54, %s56
      %p60 = scmp.eq.s32.totalorder %s20, 0
      %p61 = por %p59, %p60
      %p62 = scmp.ne.s32.totalorder %s54, %s56
      %p63 = scmp.eq.s32.totalorder %s25, 3
      %p64 = por %p62, %p63
      %p65 = scmp.ne.s32.totalorder %s56, %s57
      %p66 = scmp.eq.s32.totalorder %s25, 0
      %p67 = por %p65, %p66
      %p68 = scmp.ne.s32.totalorder %s56, %s57
      %p69 = scmp.eq.s32.totalorder %s26, 3
      %p70 = por %p68, %p69
      %p72 = scmp.ne.s32.totalorder %s57, %s71
      %p73 = scmp.eq.s32.totalorder %s26, 0
      %p74 = por %p72, %p73
      %s76 = sadd.s32 %s75, 1
      %p79 = scmp.eq.s32.totalorder %s20, 3
      %p80 = scmp.ne.s32.totalorder %s75, %s77
      %p81 = scmp.eq.s32.totalorder %s20, 0
      %p82 = por %p80, %p81
      %p83 = scmp.ne.s32.totalorder %s75, %s77
      %p84 = scmp.eq.s32.totalorder %s25, 3
      %p85 = por %p83, %p84
      %p86 = scmp.ne.s32.totalorder %s77, %s78
      %p87 = scmp.eq.s32.totalorder %s25, 0
      %p88 = por %p86, %p87
      %p89 = scmp.ne.s32.totalorder %s77, %s78
      %p90 = scmp.eq.s32.totalorder %s26, 3
      %p91 = por %p89, %p90
      %p93 = scmp.ne.s32.totalorder %s78, %s92
      %p94 = scmp.eq.s32.totalorder %s26, 0
      %p95 = por %p93, %p94
      %s97 = sadd.s32 %s96, 1
      %p100 = scmp.eq.s32.totalorder %s20, 3
      %p101 = scmp.ne.s32.totalorder %s96, %s98
      %p102 = scmp.eq.s32.totalorder %s20, 0
      %p103 = por %p101, %p102
      %p104 = scmp.ne.s32.totalorder %s96, %s98
      %p105 = scmp.eq.s32.totalorder %s25, 3
      %p106 = por %p104, %p105
      %p107 = scmp.ne.s32.totalorder %s98, %s99
      %p108 = scmp.eq.s32.totalorder %s25, 0
      %p109 = por %p107, %p108
      %p110 = scmp.ne.s32.totalorder %s98, %s99
      %p111 = scmp.eq.s32.totalorder %s26, 3
      %p112 = por %p110, %p111
      %p114 = scmp.ne.s32.totalorder %s99, %s113
      %p115 = scmp.eq.s32.totalorder %s26, 0
      %p116 = por %p114, %p115
      %s118 = sadd.s32 %s117, 1
      %p121 = scmp.eq.s32.totalorder %s20, 3
      %p122 = scmp.ne.s32.totalorder %s117, %s119
      %p123 = scmp.eq.s32.totalorder %s20, 0
      %p124 = por %p122, %p123
      %p125 = scmp.ne.s32.totalorder %s117, %s119
      %p126 = scmp.eq.s32.totalorder %s25, 3
      %p127 = por %p125, %p126
      %p128 = scmp.ne.s32.totalorder %s119, %s120
      %p129 = scmp.eq.s32.totalorder %s25, 0
      %p130 = por %p128, %p129
      %p131 = scmp.ne.s32.totalorder %s119, %s120
      %p132 = scmp.eq.s32.totalorder %s26, 3
      %p133 = por %p131, %p132
      %p135 = scmp.ne.s32.totalorder %s120, %s134
      %p136 = scmp.eq.s32.totalorder %s26, 0
      %p137 = por %p135, %p136
      %s139 = sadd.s32 %s138, 1
      %p142 = scmp.eq.s32.totalorder %s20, 3
      %p143 = scmp.ne.s32.totalorder %s138, %s140
      %p144 = scmp.eq.s32.totalorder %s20, 0
      %p145 = por %p143, %p144
      %p146 = scmp.ne.s32.totalorder %s138, %s140
      %p147 = scmp.eq.s32.totalorder %s25, 3
      %p148 = por %p146, %p147
      %p149 = scmp.ne.s32.totalorder %s140, %s141
      %p150 = scmp.eq.s32.totalorder %s25, 0
      %p151 = por %p149, %p150
      %p152 = scmp.ne.s32.totalorder %s140, %s141
      %p153 = scmp.eq.s32.totalorder %s26, 3
      %p154 = por %p152, %p153
      %p156 = scmp.ne.s32.totalorder %s141, %s155
      %p157 = scmp.eq.s32.totalorder %s26, 0
      %p158 = por %p156, %p157
      %s159 = ssub.s32 %s20, %s27
      %p160 = scmp.eq.s32.totalorder %s159, 0
      %s162 = sadd.s32 %s161, 1
      %s163 = scalar_select %p160, %s161, %s162
      %p166 = pneg %p160
      %p167 = scmp.eq.s32.totalorder %s20, 3
      %p168 = por %p166, %p167
      %p169 = scmp.ne.s32.totalorder %s161, %s164
      %p170 = scmp.eq.s32.totalorder %s20, 0
      %p171 = por %p169, %p170
      %p172 = scmp.ne.s32.totalorder %s161, %s164
      %p173 = scmp.eq.s32.totalorder %s25, 3
      %p174 = por %p172, %p173
      %p175 = scmp.ne.s32.totalorder %s164, %s165
      %p176 = scmp.eq.s32.totalorder %s25, 0
      %p177 = por %p175, %p176
      %p178 = scmp.ne.s32.totalorder %s164, %s165
      %p179 = scmp.eq.s32.totalorder %s26, 3
      %p180 = por %p178, %p179
      %p182 = scmp.ne.s32.totalorder %s165, %s181
      %p183 = scmp.eq.s32.totalorder %s26, 0
      %p184 = por %p182, %p183
      %p185 = scmp.le.s32.totalorder 1, %s20
      %p186 = scmp.lt.s32.totalorder %s20, 5
      %p187 = pnand %p185, %p186
      %p188 = pneg %p187
      // Predicated region
      $region9: #{tpu_custom_call.1} parent=5 // pred_check
        _
      $region10: #{tpu_custom_call.1} parent=5 // pred_check_branch
        %190 = sbr.rel (%p187) target = $region12
      $region11: #{tpu_custom_call.1} parent=5 // pred_region
        %s191 = ssub.s32 %s20, 1
        // Predicated region
        $region13: #{tpu_custom_call.1} parent=11 // pred_check
          %p192 = pneg %p67
        $region14: #{tpu_custom_call.1} parent=11 // pred_check_branch
          %194 = sbr.rel (%p192) target = $region16
        $region15: #{tpu_custom_call.1} parent=11 // pred_region
          %196 = vsyncadd [#allocation8], 0
          %s197 = sshll.u32 %s1, 4
          %s198 = int_to_ptr.hbm [resolvable:$true] %s197
          %s199 = sshll.u32 [#allocation7], 4
          %s200 = int_to_ptr.vmem [resolvable:$true] %s199
          %205 = dma.hbm_to_vmem [thread:$0]  %s198, 6144, %s200, [#allocation8], 384, 384, 24
        $region16: #{tpu_custom_call.1} parent=11 // pred_fallthru
          _
        // Predicated region
        $region17: #{tpu_custom_call.1} parent=11 // pred_check
          %p206 = pneg %p88
        $region18: #{tpu_custom_call.1} parent=11 // pred_check_branch
          %208 = sbr.rel (%p206) target = $region20
        $region19: #{tpu_custom_call.1} parent=11 // pred_region
          %210 = vsyncadd [#allocation8], 0
          %s212 = sshll.u32 %s2, 4
          %s213 = int_to_ptr.hbm [resolvable:$true] %s212
          %s214 = sshll.u32 [#allocation9], 4
          %s215 = int_to_ptr.vmem [resolvable:$true] %s214
          %217 = dma.hbm_to_vmem [thread:$0]  %s213, 48, %s215, [#allocation8]
        $region20: #{tpu_custom_call.1} parent=11 // pred_fallthru
          _
        // Predicated region
        $region21: #{tpu_custom_call.1} parent=11 // pred_check
          %p218 = pneg %p109
        $region22: #{tpu_custom_call.1} parent=11 // pred_check_branch
          %220 = sbr.rel (%p218) target = $region24
        $region23: #{tpu_custom_call.1} parent=11 // pred_region
          %222 = vsyncadd [#allocation11], 0
          %s223 = sshll.u32 %s3, 4
          %s224 = int_to_ptr.hbm [resolvable:$true] %s223
          %s225 = sshll.u32 [#allocation10], 4
          %s226 = int_to_ptr.vmem [resolvable:$true] %s225
          %231 = dma.hbm_to_vmem [thread:$0]  %s224, 4096, %s226, [#allocation11], 128, 128, 8
        $region24: #{tpu_custom_call.1} parent=11 // pred_fallthru
          _
        // Predicated region
        $region25: #{tpu_custom_call.1} parent=11 // pred_check
          %p232 = pneg %p130
        $region26: #{tpu_custom_call.1} parent=11 // pred_check_branch
          %234 = sbr.rel (%p232) target = $region28
        $region27: #{tpu_custom_call.1} parent=11 // pred_region
          %236 = vsyncadd [#allocation11], 0
          %s237 = sshll.u32 %s4, 4
          %s238 = int_to_ptr.hbm [resolvable:$true] %s237
          %s239 = sshll.u32 [#allocation12], 4
          %s240 = int_to_ptr.vmem [resolvable:$true] %s239
          %245 = dma.hbm_to_vmem [thread:$0]  %s238, 2048, %s240, [#allocation11], 128, 128, 8
        $region28: #{tpu_custom_call.1} parent=11 // pred_fallthru
          _
        // Predicated region
        $region29: #{tpu_custom_call.1} parent=11 // pred_check
          %p246 = pneg %p151
        $region30: #{tpu_custom_call.1} parent=11 // pred_check_branch
          %248 = sbr.rel (%p246) target = $region32
        $region31: #{tpu_custom_call.1} parent=11 // pred_region
          _
        $region32: #{tpu_custom_call.1} parent=11 // pred_fallthru
          _
      $region12: #{tpu_custom_call.1} parent=5 // pred_fallthru
        _
      %p249 = scmp.lt.s32.totalorder %s20, 4
      // Predicated region
      $region33: #{tpu_custom_call.1} parent=5 // pred_check
        %p250 = pneg %p249
      $region34: #{tpu_custom_call.1} parent=5 // pred_check_branch
        %252 = sbr.rel (%p250) target = $region36
      $region35: #{tpu_custom_call.1} parent=5 // pred_region
        // Predicated region
        $region37: #{tpu_custom_call.1} parent=35 // pred_check
          %p253 = pneg %p40
        $region38: #{tpu_custom_call.1} parent=35 // pred_check_branch
          %255 = sbr.rel (%p253) target = $region40
        $region39: #{tpu_custom_call.1} parent=35 // pred_region
          %s256 = sand.u32 %s30, 1
          %s257 = scalar_lea.sflag [#allocation5], %s256
          %s258 = sand.u32 %s30, 1
          %s259 = smul.addr %s258, 64
          %s260 = scalar_lea.vmem [#allocation4], %s259
          %s261 = smul.u32 8, %s20
          %263 = vsyncadd %s257, 0
          %s264 = smul.addr %s261, 8
          %s265 = scalar_lea.hbm %s0, %s264
          %s266 = sshll.u32 %s265, 4
          %s267 = int_to_ptr.hbm [resolvable:$true] %s266
          %s268 = sshll.u32 %s260, 4
          %s269 = int_to_ptr.vmem [resolvable:$true] %s268
          %274 = dma.hbm_to_vmem [thread:$0]  %s267, 1024, %s269, %s257, 128, 128, 8
        $region40: #{tpu_custom_call.1} parent=35 // pred_fallthru
          _
      $region36: #{tpu_custom_call.1} parent=5 // pred_fallthru
        _
      %p275 = scmp.le.s32.totalorder 1, %s20
      %p276 = scmp.lt.s32.totalorder %s20, 5
      %p277 = pnand %p275, %p276
      %p278 = pneg %p277
      // Predicated region
      $region41: #{tpu_custom_call.1} parent=5 // pred_check
        _
      $region42: #{tpu_custom_call.1} parent=5 // pred_check_branch
        %280 = sbr.rel (%p277) target = $region44
      $region43: #{tpu_custom_call.1} parent=5 // pred_region
        %s281 = ssub.s32 %s20, 1
        %s282 = sand.u32 %s33, 1
        %s283 = scalar_lea.sflag [#allocation5], %s282
        %s284 = sand.u32 %s33, 1
        %s285 = smul.addr %s284, 64
        %s286 = scalar_lea.vmem [#allocation4], %s285
        // Predicated region
        $region45: #{tpu_custom_call.1} parent=43 // pred_check
          %p287 = pneg %p46
        $region46: #{tpu_custom_call.1} parent=43 // pred_check_branch
          %289 = sbr.rel (%p287) target = $region48
        $region47: #{tpu_custom_call.1} parent=43 // pred_region
          %291 = dma.done %s283, 1024
        $region48: #{tpu_custom_call.1} parent=43 // pred_fallthru
          _
        // Predicated region
        $region49: #{tpu_custom_call.1} parent=43 // pred_check
          %p292 = pneg %p67
        $region50: #{tpu_custom_call.1} parent=43 // pred_check_branch
          %294 = sbr.rel (%p292) target = $region52
        $region51: #{tpu_custom_call.1} parent=43 // pred_region
          %296 = dma.done [#allocation8], 6144
        $region52: #{tpu_custom_call.1} parent=43 // pred_fallthru
          _
        // Predicated region
        $region53: #{tpu_custom_call.1} parent=43 // pred_check
          %p297 = pneg %p88
        $region54: #{tpu_custom_call.1} parent=43 // pred_check_branch
          %299 = sbr.rel (%p297) target = $region56
        $region55: #{tpu_custom_call.1} parent=43 // pred_region
          %301 = dma.done [#allocation8], 48
        $region56: #{tpu_custom_call.1} parent=43 // pred_fallthru
          _
        // Predicated region
        $region57: #{tpu_custom_call.1} parent=43 // pred_check
          %p302 = pneg %p109
        $region58: #{tpu_custom_call.1} parent=43 // pred_check_branch
          %304 = sbr.rel (%p302) target = $region60
        $region59: #{tpu_custom_call.1} parent=43 // pred_region
          %306 = dma.done [#allocation11], 4096
        $region60: #{tpu_custom_call.1} parent=43 // pred_fallthru
          _
        // Predicated region
        $region61: #{tpu_custom_call.1} parent=43 // pred_check
          %p307 = pneg %p130
        $region62: #{tpu_custom_call.1} parent=43 // pred_check_branch
          %309 = sbr.rel (%p307) target = $region64
        $region63: #{tpu_custom_call.1} parent=43 // pred_region
          %311 = dma.done [#allocation11], 2048
        $region64: #{tpu_custom_call.1} parent=43 // pred_fallthru
          _
        %s312 = sand.u32 %s33, 1
        %s313 = scalar_lea.sflag [#allocation5], %s312
        %s314 = sand.u32 %s33, 1
        %s315 = smul.addr %s314, 64
        %s316 = scalar_lea.vmem [#allocation4], %s315
        %p317 = pneg %p46
        %p318 = pneg %p43
        %p319 = pneg %p67
        %p320 = pneg %p64
        %p321 = pneg %p88
        %p322 = pneg %p85
        %p323 = pneg %p109
        %p324 = pneg %p106
        %p325 = pneg %p130
        %p326 = pneg %p127
        %p327 = pneg %p151
        %p328 = pneg %p148
        %p329 = pneg %p177
        %p330 = pneg %p174
        %s331 = sand.u32 %s164, 1
        %s332 = scalar_lea.sflag [#allocation6], %s331
        %s333 = sand.u32 %s164, 1
        %s334 = smul.addr %s333, 64
        %s335 = scalar_lea.vmem [#allocation13], %s334
        %s336 = smul.u32 8, %s25
        %s337 = smul.u32 8, %s25
        %v338 = vld [vmem:[%s286] sm:$0xff]
        %v339 = vld [vmem:[%s286 + $0x8] sm:$0xff]
        %v340 = vld [vmem:[%s286 + $0x10] sm:$0xff]
        %v341 = vld [vmem:[%s286 + $0x18] sm:$0xff]
        %v342 = vld [vmem:[%s286 + $0x20] sm:$0xff]
        %v343 = vld [vmem:[%s286 + $0x28] sm:$0xff]
        %v344 = vld [vmem:[%s286 + $0x30] sm:$0xff]
        %v345 = vld [vmem:[%s286 + $0x38] sm:$0xff]
        %v346 = vld [vmem:[#allocation7] sm:$0xff]
        %v347 = vld [vmem:[#allocation7 + $0x8] sm:$0xff]
        %v348 = vld [vmem:[#allocation7 + $0x10] sm:$0xff]
        %v349 = vld [vmem:[#allocation7 + $0x18] sm:$0xff]
        %v350 = vld [vmem:[#allocation7 + $0x20] sm:$0xff]
        %v351 = vld [vmem:[#allocation7 + $0x28] sm:$0xff]
        %v352 = vld [vmem:[#allocation7 + $0x30] sm:$0xff]
        %v353 = vld [vmem:[#allocation7 + $0x38] sm:$0xff]
        %v354 = vld [vmem:[#allocation7 + $0x40] sm:$0xff]
        %v355 = vld [vmem:[#allocation7 + $0x48] sm:$0xff]
        %v356 = vld [vmem:[#allocation7 + $0x50] sm:$0xff]
        %v357 = vld [vmem:[#allocation7 + $0x58] sm:$0xff]
        %v358 = vld [vmem:[#allocation7 + $0x60] sm:$0xff]
        %v359 = vld [vmem:[#allocation7 + $0x68] sm:$0xff]
        %v360 = vld [vmem:[#allocation7 + $0x70] sm:$0xff]
        %v361 = vld [vmem:[#allocation7 + $0x78] sm:$0xff]
        %v362 = vld [vmem:[#allocation7 + $0x80] sm:$0xff]
        %v363 = vld [vmem:[#allocation7 + $0x88] sm:$0xff]
        %v364 = vld [vmem:[#allocation7 + $0x90] sm:$0xff]
        %v365 = vld [vmem:[#allocation7 + $0x98] sm:$0xff]
        %v366 = vld [vmem:[#allocation7 + $0xa0] sm:$0xff]
        %v367 = vld [vmem:[#allocation7 + $0xa8] sm:$0xff]
        %v368 = vld [vmem:[#allocation7 + $0xb0] sm:$0xff]
        %v369 = vld [vmem:[#allocation7 + $0xb8] sm:$0xff]
        %v370 = vld [vmem:[#allocation7 + $0xc0] sm:$0xff]
        %v371 = vld [vmem:[#allocation7 + $0xc8] sm:$0xff]
        %v372 = vld [vmem:[#allocation7 + $0xd0] sm:$0xff]
        %v373 = vld [vmem:[#allocation7 + $0xd8] sm:$0xff]
        %v374 = vld [vmem:[#allocation7 + $0xe0] sm:$0xff]
        %v375 = vld [vmem:[#allocation7 + $0xe8] sm:$0xff]
        %v376 = vld [vmem:[#allocation7 + $0xf0] sm:$0xff]
        %v377 = vld [vmem:[#allocation7 + $0xf8] sm:$0xff]
        %v378 = vld [vmem:[#allocation7 + $0x100] sm:$0xff]
        %v379 = vld [vmem:[#allocation7 + $0x108] sm:$0xff]
        %v380 = vld [vmem:[#allocation7 + $0x110] sm:$0xff]
        %v381 = vld [vmem:[#allocation7 + $0x118] sm:$0xff]
        %v382 = vld [vmem:[#allocation7 + $0x120] sm:$0xff]
        %v383 = vld [vmem:[#allocation7 + $0x128] sm:$0xff]
        %v384 = vld [vmem:[#allocation7 + $0x130] sm:$0xff]
        %v385 = vld [vmem:[#allocation7 + $0x138] sm:$0xff]
        %v386 = vld [vmem:[#allocation7 + $0x140] sm:$0xff]
        %v387 = vld [vmem:[#allocation7 + $0x148] sm:$0xff]
        %v388 = vld [vmem:[#allocation7 + $0x150] sm:$0xff]
        %v389 = vld [vmem:[#allocation7 + $0x158] sm:$0xff]
        %v390 = vld [vmem:[#allocation7 + $0x160] sm:$0xff]
        %v391 = vld [vmem:[#allocation7 + $0x168] sm:$0xff]
        %v392 = vld [vmem:[#allocation7 + $0x170] sm:$0xff]
        %v393 = vld [vmem:[#allocation7 + $0x178] sm:$0xff]
        %v394 = vld [vmem:[#allocation9] sm:$0x7]
        %v396 = vperm.slane %v394, 0
        %v397 = vperm.slane %v394, 1
        %v398 = vperm.slane %v394, 2
        %402 = vmatpush.msra.mxu0 %v391
        %403 = vmatpush.msra.mxu0 %v388
        %404 = vmatpush.msra.mxu0 %v385
        %405 = vmatpush.msra.mxu0 %v382
        %406 = vmatpush.msra.mxu0 %v379
        %407 = vmatpush.msra.mxu0 %v376
        %408 = vmatpush.msra.mxu0 %v373
        %409 = vmatpush.msra.mxu0 %v370
        %410 = vmatpush.msra.mxu0 %v367
        %411 = vmatpush.msra.mxu0 %v364
        %412 = vmatpush.msra.mxu0 %v361
        %413 = vmatpush.msra.mxu0 %v358
        %414 = vmatpush.msra.mxu0 %v355
        %415 = vmatpush.msra.mxu0 %v352
        %416 = vmatpush.msra.mxu0 %v349
        %417 = vmatpush.msra.mxu0 %v346
        %418 = vmatmul.f32.gmra.mxu0 %v338
        %v419 = vpop.f32.mrf.mxu0
        %v420 = vadd.f32 %v396, %v419
        %421 = vmatmul.f32.gmra.mxu0 %v339
        %v422 = vpop.f32.mrf.mxu0
        %v423 = vadd.f32 %v396, %v422
        %424 = vmatmul.f32.gmra.mxu0 %v340
        %v425 = vpop.f32.mrf.mxu0
        %v426 = vadd.f32 %v396, %v425
        %427 = vmatmul.f32.gmra.mxu0 %v341
        %v428 = vpop.f32.mrf.mxu0
        %v429 = vadd.f32 %v396, %v428
        %430 = vmatmul.f32.gmra.mxu0 %v342
        %v431 = vpop.f32.mrf.mxu0
        %v432 = vadd.f32 %v396, %v431
        %433 = vmatmul.f32.gmra.mxu0 %v343
        %v434 = vpop.f32.mrf.mxu0
        %v435 = vadd.f32 %v396, %v434
        %436 = vmatmul.f32.gmra.mxu0 %v344
        %v437 = vpop.f32.mrf.mxu0
        %v438 = vadd.f32 %v396, %v437
        %439 = vmatmul.f32.gmra.mxu0 %v345
        %v440 = vpop.f32.mrf.mxu0
        %v441 = vadd.f32 %v396, %v440
        %442 = vdwg.mxu0
        %443 = vmatpush.msra.mxu0 %v392
        %444 = vmatpush.msra.mxu0 %v389
        %445 = vmatpush.msra.mxu0 %v386
        %446 = vmatpush.msra.mxu0 %v383
        %447 = vmatpush.msra.mxu0 %v380
        %448 = vmatpush.msra.mxu0 %v377
        %449 = vmatpush.msra.mxu0 %v374
        %450 = vmatpush.msra.mxu0 %v371
        %451 = vmatpush.msra.mxu0 %v368
        %452 = vmatpush.msra.mxu0 %v365
        %453 = vmatpush.msra.mxu0 %v362
        %454 = vmatpush.msra.mxu0 %v359
        %455 = vmatpush.msra.mxu0 %v356
        %456 = vmatpush.msra.mxu0 %v353
        %457 = vmatpush.msra.mxu0 %v350
        %458 = vmatpush.msra.mxu0 %v347
        %459 = vmatmul.f32.gmra.mxu0 %v338
        %v460 = vpop.f32.mrf.mxu0
        %v461 = vadd.f32 %v397, %v460
        %462 = vmatmul.f32.gmra.mxu0 %v339
        %v463 = vpop.f32.mrf.mxu0
        %v464 = vadd.f32 %v397, %v463
        %465 = vmatmul.f32.gmra.mxu0 %v340
        %v466 = vpop.f32.mrf.mxu0
        %v467 = vadd.f32 %v397, %v466
        %468 = vmatmul.f32.gmra.mxu0 %v341
        %v469 = vpop.f32.mrf.mxu0
        %v470 = vadd.f32 %v397, %v469
        %471 = vmatmul.f32.gmra.mxu0 %v342
        %v472 = vpop.f32.mrf.mxu0
        %v473 = vadd.f32 %v397, %v472
        %474 = vmatmul.f32.gmra.mxu0 %v343
        %v475 = vpop.f32.mrf.mxu0
        %v476 = vadd.f32 %v397, %v475
        %477 = vmatmul.f32.gmra.mxu0 %v344
        %v478 = vpop.f32.mrf.mxu0
        %v479 = vadd.f32 %v397, %v478
        %480 = vmatmul.f32.gmra.mxu0 %v345
        %v481 = vpop.f32.mrf.mxu0
        %v482 = vadd.f32 %v397, %v481
        %483 = vdwg.mxu0
        %484 = vmatpush.msra.mxu0 %v393
        %485 = vmatpush.msra.mxu0 %v390
        %486 = vmatpush.msra.mxu0 %v387
        %487 = vmatpush.msra.mxu0 %v384
        %488 = vmatpush.msra.mxu0 %v381
        %489 = vmatpush.msra.mxu0 %v378
        %490 = vmatpush.msra.mxu0 %v375
        %491 = vmatpush.msra.mxu0 %v372
        %492 = vmatpush.msra.mxu0 %v369
        %493 = vmatpush.msra.mxu0 %v366
        %494 = vmatpush.msra.mxu0 %v363
        %495 = vmatpush.msra.mxu0 %v360
        %496 = vmatpush.msra.mxu0 %v357
        %497 = vmatpush.msra.mxu0 %v354
        %498 = vmatpush.msra.mxu0 %v351
        %499 = vmatpush.msra.mxu0 %v348
        %500 = vmatmul.f32.gmra.mxu0 %v338
        %v501 = vpop.f32.mrf.mxu0
        %v502 = vadd.f32 %v398, %v501
        %503 = vmatmul.f32.gmra.mxu0 %v339
        %v504 = vpop.f32.mrf.mxu0
        %v505 = vadd.f32 %v398, %v504
        %506 = vmatmul.f32.gmra.mxu0 %v340
        %v507 = vpop.f32.mrf.mxu0
        %v508 = vadd.f32 %v398, %v507
        %509 = vmatmul.f32.gmra.mxu0 %v341
        %v510 = vpop.f32.mrf.mxu0
        %v511 = vadd.f32 %v398, %v510
        %512 = vmatmul.f32.gmra.mxu0 %v342
        %v513 = vpop.f32.mrf.mxu0
        %v514 = vadd.f32 %v398, %v513
        %515 = vmatmul.f32.gmra.mxu0 %v343
        %v516 = vpop.f32.mrf.mxu0
        %v517 = vadd.f32 %v398, %v516
        %518 = vmatmul.f32.gmra.mxu0 %v344
        %v519 = vpop.f32.mrf.mxu0
        %v520 = vadd.f32 %v398, %v519
        %521 = vmatmul.f32.gmra.mxu0 %v345
        %v522 = vpop.f32.mrf.mxu0
        %v523 = vadd.f32 %v398, %v522
        %524 = vdwg.mxu0
        %525 = vst [vmem:[#allocation2] sm:$0xff] %v420
        %526 = vst [vmem:[#allocation2 + $0x8] sm:$0xff] %v461
        %527 = vst [vmem:[#allocation2 + $0x10] sm:$0xff] %v502
        %528 = vst [vmem:[#allocation2 + $0x18] sm:$0xff] %v423
        %529 = vst [vmem:[#allocation2 + $0x20] sm:$0xff] %v464
        %530 = vst [vmem:[#allocation2 + $0x28] sm:$0xff] %v505
        %531 = vst [vmem:[#allocation2 + $0x30] sm:$0xff] %v426
        %532 = vst [vmem:[#allocation2 + $0x38] sm:$0xff] %v467
        %533 = vst [vmem:[#allocation2 + $0x40] sm:$0xff] %v508
        %534 = vst [vmem:[#allocation2 + $0x48] sm:$0xff] %v429
        %535 = vst [vmem:[#allocation2 + $0x50] sm:$0xff] %v470
        %536 = vst [vmem:[#allocation2 + $0x58] sm:$0xff] %v511
        %537 = vst [vmem:[#allocation2 + $0x60] sm:$0xff] %v432
        %538 = vst [vmem:[#allocation2 + $0x68] sm:$0xff] %v473
        %539 = vst [vmem:[#allocation2 + $0x70] sm:$0xff] %v514
        %540 = vst [vmem:[#allocation2 + $0x78] sm:$0xff] %v435
        %541 = vst [vmem:[#allocation2 + $0x80] sm:$0xff] %v476
        %542 = vst [vmem:[#allocation2 + $0x88] sm:$0xff] %v517
        %543 = vst [vmem:[#allocation2 + $0x90] sm:$0xff] %v438
        %544 = vst [vmem:[#allocation2 + $0x98] sm:$0xff] %v479
        %545 = vst [vmem:[#allocation2 + $0xa0] sm:$0xff] %v520
        %546 = vst [vmem:[#allocation2 + $0xa8] sm:$0xff] %v441
        %547 = vst [vmem:[#allocation2 + $0xb0] sm:$0xff] %v482
        %548 = vst [vmem:[#allocation2 + $0xb8] sm:$0xff] %v523
        %v549 = vld [vmem:[#allocation2] sm:$0xff]
        %v550 = vld [vmem:[#allocation2 + $0x18] sm:$0xff]
        %v551 = vld [vmem:[#allocation2 + $0x30] sm:$0xff]
        %v552 = vld [vmem:[#allocation2 + $0x48] sm:$0xff]
        %v553 = vld [vmem:[#allocation2 + $0x60] sm:$0xff]
        %v554 = vld [vmem:[#allocation2 + $0x78] sm:$0xff]
        %v555 = vld [vmem:[#allocation2 + $0x90] sm:$0xff]
        %v556 = vld [vmem:[#allocation2 + $0xa8] sm:$0xff]
        %v557 = vld [vmem:[#allocation2 + $0x8] sm:$0xff]
        %v558 = vld [vmem:[#allocation2 + $0x20] sm:$0xff]
        %v559 = vld [vmem:[#allocation2 + $0x38] sm:$0xff]
        %v560 = vld [vmem:[#allocation2 + $0x50] sm:$0xff]
        %v561 = vld [vmem:[#allocation2 + $0x68] sm:$0xff]
        %v562 = vld [vmem:[#allocation2 + $0x80] sm:$0xff]
        %v563 = vld [vmem:[#allocation2 + $0x98] sm:$0xff]
        %v564 = vld [vmem:[#allocation2 + $0xb0] sm:$0xff]
        %vm565 = vcmask 261120
        %v567 = vsel %vm565, %v549, 0
        %v570 = vsel %vm565, %v550, 0
        %v573 = vsel %vm565, %v557, 0
        %v576 = vsel %vm565, %v558, 0
        %578 = vmatpush.xpose.msra.mxu0 0.0
        %579 = vmatpush.xpose.msra.mxu0 0.0
        %580 = vmatpush.xpose.msra.mxu0 0.0
        %581 = vmatpush.xpose.msra.mxu0 0.0
        %582 = vmatpush.xpose.msra.mxu0 0.0
        %583 = vmatpush.xpose.msra.mxu0 0.0
        %584 = vmatpush.xpose.msra.mxu0 0.0
        %585 = vmatpush.xpose.msra.mxu0 0.0
        %586 = vmatpush.xpose.msra.mxu0 0.0
        %587 = vmatpush.xpose.msra.mxu0 0.0
        %588 = vmatpush.xpose.msra.mxu0 0.0
        %589 = vmatpush.xpose.msra.mxu0 0.0
        %590 = vmatpush.xpose.msra.mxu0 0.0
        %591 = vmatpush.xpose.msra.mxu0 0.0
        %592 = vmatpush.xpose.msra.mxu0 %v576
        %593 = vmatpush.xpose.msra.mxu0 %v573
        %594 = vmatmul.f32.gmra.mxu0 %v567
        %v595 = vpop.f32.mrf.mxu0
        %v596 = vadd.f32 0.0, %v595
        %597 = vmatmul.f32.gmra.mxu0 %v570
        %v598 = vpop.f32.mrf.mxu0
        %v599 = vadd.f32 0.0, %v598
        %600 = vdwg.mxu0
        %v602 = vsel %vm565, %v551, 0
        %v605 = vsel %vm565, %v552, 0
        %v608 = vsel %vm565, %v559, 0
        %v611 = vsel %vm565, %v560, 0
        %613 = vmatpush.xpose.msra.mxu0 0.0
        %614 = vmatpush.xpose.msra.mxu0 0.0
        %615 = vmatpush.xpose.msra.mxu0 0.0
        %616 = vmatpush.xpose.msra.mxu0 0.0
        %617 = vmatpush.xpose.msra.mxu0 0.0
        %618 = vmatpush.xpose.msra.mxu0 0.0
        %619 = vmatpush.xpose.msra.mxu0 0.0
        %620 = vmatpush.xpose.msra.mxu0 0.0
        %621 = vmatpush.xpose.msra.mxu0 0.0
        %622 = vmatpush.xpose.msra.mxu0 0.0
        %623 = vmatpush.xpose.msra.mxu0 0.0
        %624 = vmatpush.xpose.msra.mxu0 0.0
        %625 = vmatpush.xpose.msra.mxu0 0.0
        %626 = vmatpush.xpose.msra.mxu0 0.0
        %627 = vmatpush.xpose.msra.mxu0 %v611
        %628 = vmatpush.xpose.msra.mxu0 %v608
        %629 = vmatmul.f32.gmra.mxu0 %v602
        %v630 = vpop.f32.mrf.mxu0
        %v631 = vadd.f32 0.0, %v630
        %632 = vmatmul.f32.gmra.mxu0 %v605
        %v633 = vpop.f32.mrf.mxu0
        %v634 = vadd.f32 0.0, %v633
        %635 = vdwg.mxu0
        %v637 = vsel %vm565, %v553, 0
        %v640 = vsel %vm565, %v554, 0
        %v643 = vsel %vm565, %v561, 0
        %v646 = vsel %vm565, %v562, 0
        %648 = vmatpush.xpose.msra.mxu0 0.0
        %649 = vmatpush.xpose.msra.mxu0 0.0
        %650 = vmatpush.xpose.msra.mxu0 0.0
        %651 = vmatpush.xpose.msra.mxu0 0.0
        %652 = vmatpush.xpose.msra.mxu0 0.0
        %653 = vmatpush.xpose.msra.mxu0 0.0
        %654 = vmatpush.xpose.msra.mxu0 0.0
        %655 = vmatpush.xpose.msra.mxu0 0.0
        %656 = vmatpush.xpose.msra.mxu0 0.0
        %657 = vmatpush.xpose.msra.mxu0 0.0
        %658 = vmatpush.xpose.msra.mxu0 0.0
        %659 = vmatpush.xpose.msra.mxu0 0.0
        %660 = vmatpush.xpose.msra.mxu0 0.0
        %661 = vmatpush.xpose.msra.mxu0 0.0
        %662 = vmatpush.xpose.msra.mxu0 %v646
        %663 = vmatpush.xpose.msra.mxu0 %v643
        %664 = vmatmul.f32.gmra.mxu0 %v637
        %v665 = vpop.f32.mrf.mxu0
        %v666 = vadd.f32 0.0, %v665
        %667 = vmatmul.f32.gmra.mxu0 %v640
        %v668 = vpop.f32.mrf.mxu0
        %v669 = vadd.f32 0.0, %v668
        %670 = vdwg.mxu0
        %v672 = vsel %vm565, %v555, 0
        %v675 = vsel %vm565, %v556, 0
        %v678 = vsel %vm565, %v563, 0
        %v681 = vsel %vm565, %v564, 0
        %683 = vmatpush.xpose.msra.mxu0 0.0
        %684 = vmatpush.xpose.msra.mxu0 0.0
        %685 = vmatpush.xpose.msra.mxu0 0.0
        %686 = vmatpush.xpose.msra.mxu0 0.0
        %687 = vmatpush.xpose.msra.mxu0 0.0
        %688 = vmatpush.xpose.msra.mxu0 0.0
        %689 = vmatpush.xpose.msra.mxu0 0.0
        %690 = vmatpush.xpose.msra.mxu0 0.0
        %691 = vmatpush.xpose.msra.mxu0 0.0
        %692 = vmatpush.xpose.msra.mxu0 0.0
        %693 = vmatpush.xpose.msra.mxu0 0.0
        %694 = vmatpush.xpose.msra.mxu0 0.0
        %695 = vmatpush.xpose.msra.mxu0 0.0
        %696 = vmatpush.xpose.msra.mxu0 0.0
        %697 = vmatpush.xpose.msra.mxu0 %v681
        %698 = vmatpush.xpose.msra.mxu0 %v678
        %699 = vmatmul.f32.gmra.mxu0 %v672
        %v700 = vpop.f32.mrf.mxu0
        %v701 = vadd.f32 0.0, %v700
        %702 = vmatmul.f32.gmra.mxu0 %v675
        %v703 = vpop.f32.mrf.mxu0
        %v704 = vadd.f32 0.0, %v703
        %705 = vdwg.mxu0
        %v706 = vld [vmem:[#allocation10] sm:$0xff]
        %v707 = vld [vmem:[#allocation10 + $0x8] sm:$0xff]
        %v708 = vld [vmem:[#allocation10 + $0x10] sm:$0xff]
        %v709 = vld [vmem:[#allocation10 + $0x18] sm:$0xff]
        %v710 = vld [vmem:[#allocation10 + $0x20] sm:$0xff]
        %v711 = vld [vmem:[#allocation10 + $0x28] sm:$0xff]
        %v712 = vld [vmem:[#allocation10 + $0x30] sm:$0xff]
        %v713 = vld [vmem:[#allocation10 + $0x38] sm:$0xff]
        %v714 = vadd.f32 %v596, %v706
        %v715 = vadd.f32 %v599, %v707
        %v716 = vadd.f32 %v631, %v708
        %v717 = vadd.f32 %v634, %v709
        %v718 = vadd.f32 %v666, %v710
        %v719 = vadd.f32 %v669, %v711
        %v720 = vadd.f32 %v701, %v712
        %v721 = vadd.f32 %v704, %v713
        %vm722 = vcmask 130048
        %v723 = vsel %vm722, %v714, -inf
        %724 = vmax.xlane.f32.xlu0 %v723
        %v725 = vpop.xlane.xlu0 %724
        %v726 = vsel %vm722, %v715, -inf
        %727 = vmax.xlane.f32.xlu0 %v726
        %v728 = vpop.xlane.xlu0 %727
        %v729 = vsel %vm722, %v716, -inf
        %730 = vmax.xlane.f32.xlu0 %v729
        %v731 = vpop.xlane.xlu0 %730
        %v732 = vsel %vm722, %v717, -inf
        %733 = vmax.xlane.f32.xlu0 %v732
        %v734 = vpop.xlane.xlu0 %733
        %v735 = vsel %vm722, %v718, -inf
        %736 = vmax.xlane.f32.xlu0 %v735
        %v737 = vpop.xlane.xlu0 %736
        %v738 = vsel %vm722, %v719, -inf
        %739 = vmax.xlane.f32.xlu0 %v738
        %v740 = vpop.xlane.xlu0 %739
        %v741 = vsel %vm722, %v720, -inf
        %742 = vmax.xlane.f32.xlu0 %v741
        %v743 = vpop.xlane.xlu0 %742
        %v744 = vsel %vm722, %v721, -inf
        %745 = vmax.xlane.f32.xlu0 %v744
        %v746 = vpop.xlane.xlu0 %745
        %v747 = vsub.f32 %v714, %v725
        %v748 = vsub.f32 %v715, %v728
        %v749 = vsub.f32 %v716, %v731
        %v750 = vsub.f32 %v717, %v734
        %v751 = vsub.f32 %v718, %v737
        %v752 = vsub.f32 %v719, %v740
        %v753 = vsub.f32 %v720, %v743
        %v754 = vsub.f32 %v721, %v746
        %v755 = vmul.f32 %v747, 1.442695
        %v756 = vpow.pop %v755
        %v757 = vmul.f32 %v748, 1.442695
        %v758 = vpow.pop %v757
        %v759 = vmul.f32 %v749, 1.442695
        %v760 = vpow.pop %v759
        %v761 = vmul.f32 %v750, 1.442695
        %v762 = vpow.pop %v761
        %v763 = vmul.f32 %v751, 1.442695
        %v764 = vpow.pop %v763
        %v765 = vmul.f32 %v752, 1.442695
        %v766 = vpow.pop %v765
        %v767 = vmul.f32 %v753, 1.442695
        %v768 = vpow.pop %v767
        %v769 = vmul.f32 %v754, 1.442695
        %v770 = vpow.pop %v769
        %v771 = vsel %vm722, %v756, 0.0
        %772 = vadd.xlane.f32.xlu0 %v771
        %v773 = vpop.xlane.xlu0 %772
        %v774 = vsel %vm722, %v758, 0.0
        %775 = vadd.xlane.f32.xlu0 %v774
        %v776 = vpop.xlane.xlu0 %775
        %v777 = vsel %vm722, %v760, 0.0
        %778 = vadd.xlane.f32.xlu0 %v777
        %v779 = vpop.xlane.xlu0 %778
        %v780 = vsel %vm722, %v762, 0.0
        %781 = vadd.xlane.f32.xlu0 %v780
        %v782 = vpop.xlane.xlu0 %781
        %v783 = vsel %vm722, %v764, 0.0
        %784 = vadd.xlane.f32.xlu0 %v783
        %v785 = vpop.xlane.xlu0 %784
        %v786 = vsel %vm722, %v766, 0.0
        %787 = vadd.xlane.f32.xlu0 %v786
        %v788 = vpop.xlane.xlu0 %787
        %v789 = vsel %vm722, %v768, 0.0
        %790 = vadd.xlane.f32.xlu0 %v789
        %v791 = vpop.xlane.xlu0 %790
        %v792 = vsel %vm722, %v770, 0.0
        %793 = vadd.xlane.f32.xlu0 %v792
        %v794 = vpop.xlane.xlu0 %793
        %v795 = vld [vmem:[#allocation2 + $0x10] sm:$0xff]
        %v796 = vld [vmem:[#allocation2 + $0x28] sm:$0xff]
        %v797 = vld [vmem:[#allocation2 + $0x40] sm:$0xff]
        %v798 = vld [vmem:[#allocation2 + $0x58] sm:$0xff]
        %v799 = vld [vmem:[#allocation2 + $0x70] sm:$0xff]
        %v800 = vld [vmem:[#allocation2 + $0x88] sm:$0xff]
        %v801 = vld [vmem:[#allocation2 + $0xa0] sm:$0xff]
        %v802 = vld [vmem:[#allocation2 + $0xb8] sm:$0xff]
        %v804 = vsel %vm722, %v756, 0
        %v807 = vsel %vm722, %v758, 0
        %809 = vmatpush.msra.mxu0 0.0
        %810 = vmatpush.msra.mxu0 0.0
        %811 = vmatpush.msra.mxu0 0.0
        %812 = vmatpush.msra.mxu0 0.0
        %813 = vmatpush.msra.mxu0 0.0
        %814 = vmatpush.msra.mxu0 0.0
        %815 = vmatpush.msra.mxu0 0.0
        %816 = vmatpush.msra.mxu0 0.0
        %817 = vmatpush.msra.mxu0 0.0
        %818 = vmatpush.msra.mxu0 0.0
        %819 = vmatpush.msra.mxu0 0.0
        %820 = vmatpush.msra.mxu0 0.0
        %821 = vmatpush.msra.mxu0 0.0
        %822 = vmatpush.msra.mxu0 0.0
        %823 = vmatpush.msra.mxu0 %v796
        %824 = vmatpush.msra.mxu0 %v795
        %825 = vmatmul.f32.gmra.mxu0 %v804
        %v826 = vpop.f32.mrf.mxu0
        %v827 = vadd.f32 0.0, %v826
        %828 = vmatmul.f32.gmra.mxu0 %v807
        %v829 = vpop.f32.mrf.mxu0
        %v830 = vadd.f32 0.0, %v829
        %831 = vdwg.mxu0
        %v833 = vsel %vm722, %v760, 0
        %v836 = vsel %vm722, %v762, 0
        %838 = vmatpush.msra.mxu0 0.0
        %839 = vmatpush.msra.mxu0 0.0
        %840 = vmatpush.msra.mxu0 0.0
        %841 = vmatpush.msra.mxu0 0.0
        %842 = vmatpush.msra.mxu0 0.0
        %843 = vmatpush.msra.mxu0 0.0
        %844 = vmatpush.msra.mxu0 0.0
        %845 = vmatpush.msra.mxu0 0.0
        %846 = vmatpush.msra.mxu0 0.0
        %847 = vmatpush.msra.mxu0 0.0
        %848 = vmatpush.msra.mxu0 0.0
        %849 = vmatpush.msra.mxu0 0.0
        %850 = vmatpush.msra.mxu0 0.0
        %851 = vmatpush.msra.mxu0 0.0
        %852 = vmatpush.msra.mxu0 %v798
        %853 = vmatpush.msra.mxu0 %v797
        %854 = vmatmul.f32.gmra.mxu0 %v833
        %v855 = vpop.f32.mrf.mxu0
        %v856 = vadd.f32 0.0, %v855
        %857 = vmatmul.f32.gmra.mxu0 %v836
        %v858 = vpop.f32.mrf.mxu0
        %v859 = vadd.f32 0.0, %v858
        %860 = vdwg.mxu0
        %v862 = vsel %vm722, %v764, 0
        %v865 = vsel %vm722, %v766, 0
        %867 = vmatpush.msra.mxu0 0.0
        %868 = vmatpush.msra.mxu0 0.0
        %869 = vmatpush.msra.mxu0 0.0
        %870 = vmatpush.msra.mxu0 0.0
        %871 = vmatpush.msra.mxu0 0.0
        %872 = vmatpush.msra.mxu0 0.0
        %873 = vmatpush.msra.mxu0 0.0
        %874 = vmatpush.msra.mxu0 0.0
        %875 = vmatpush.msra.mxu0 0.0
        %876 = vmatpush.msra.mxu0 0.0
        %877 = vmatpush.msra.mxu0 0.0
        %878 = vmatpush.msra.mxu0 0.0
        %879 = vmatpush.msra.mxu0 0.0
        %880 = vmatpush.msra.mxu0 0.0
        %881 = vmatpush.msra.mxu0 %v800
        %882 = vmatpush.msra.mxu0 %v799
        %883 = vmatmul.f32.gmra.mxu0 %v862
        %v884 = vpop.f32.mrf.mxu0
        %v885 = vadd.f32 0.0, %v884
        %886 = vmatmul.f32.gmra.mxu0 %v865
        %v887 = vpop.f32.mrf.mxu0
        %v888 = vadd.f32 0.0, %v887
        %889 = vdwg.mxu0
        %v891 = vsel %vm722, %v768, 0
        %v894 = vsel %vm722, %v770, 0
        %896 = vmatpush.msra.mxu0 0.0
        %897 = vmatpush.msra.mxu0 0.0
        %898 = vmatpush.msra.mxu0 0.0
        %899 = vmatpush.msra.mxu0 0.0
        %900 = vmatpush.msra.mxu0 0.0
        %901 = vmatpush.msra.mxu0 0.0
        %902 = vmatpush.msra.mxu0 0.0
        %903 = vmatpush.msra.mxu0 0.0
        %904 = vmatpush.msra.mxu0 0.0
        %905 = vmatpush.msra.mxu0 0.0
        %906 = vmatpush.msra.mxu0 0.0
        %907 = vmatpush.msra.mxu0 0.0
        %908 = vmatpush.msra.mxu0 0.0
        %909 = vmatpush.msra.mxu0 0.0
        %910 = vmatpush.msra.mxu0 %v802
        %911 = vmatpush.msra.mxu0 %v801
        %912 = vmatmul.f32.gmra.mxu0 %v891
        %v913 = vpop.f32.mrf.mxu0
        %v914 = vadd.f32 0.0, %v913
        %915 = vmatmul.f32.gmra.mxu0 %v894
        %v916 = vpop.f32.mrf.mxu0
        %v917 = vadd.f32 0.0, %v916
        %918 = vdwg.mxu0
        %v919 = vrcp.pop %v773
        %v920 = vrcp.pop %v776
        %v921 = vrcp.pop %v779
        %v922 = vrcp.pop %v782
        %v923 = vrcp.pop %v785
        %v924 = vrcp.pop %v788
        %v925 = vrcp.pop %v791
        %v926 = vrcp.pop %v794
        %v927 = vmul.f32 %v827, %v919
        %v928 = vmul.f32 %v830, %v920
        %v929 = vmul.f32 %v856, %v921
        %v930 = vmul.f32 %v859, %v922
        %v931 = vmul.f32 %v885, %v923
        %v932 = vmul.f32 %v888, %v924
        %v933 = vmul.f32 %v914, %v925
        %v934 = vmul.f32 %v917, %v926
        %935 = vst.msk [vmem:[#allocation3] sm:$0xff] %vm565, %v927
        %936 = vst.msk [vmem:[#allocation3 + $0x8] sm:$0xff] %vm565, %v928
        %937 = vst.msk [vmem:[#allocation3 + $0x10] sm:$0xff] %vm565, %v929
        %938 = vst.msk [vmem:[#allocation3 + $0x18] sm:$0xff] %vm565, %v930
        %939 = vst.msk [vmem:[#allocation3 + $0x20] sm:$0xff] %vm565, %v931
        %940 = vst.msk [vmem:[#allocation3 + $0x28] sm:$0xff] %vm565, %v932
        %941 = vst.msk [vmem:[#allocation3 + $0x30] sm:$0xff] %vm565, %v933
        %942 = vst.msk [vmem:[#allocation3 + $0x38] sm:$0xff] %vm565, %v934
        %v943 = vld [vmem:[#allocation2] sm:$0xff]
        %v944 = vld [vmem:[#allocation2 + $0x18] sm:$0xff]
        %v945 = vld [vmem:[#allocation2 + $0x30] sm:$0xff]
        %v946 = vld [vmem:[#allocation2 + $0x48] sm:$0xff]
        %v947 = vld [vmem:[#allocation2 + $0x60] sm:$0xff]
        %v948 = vld [vmem:[#allocation2 + $0x78] sm:$0xff]
        %v949 = vld [vmem:[#allocation2 + $0x90] sm:$0xff]
        %v950 = vld [vmem:[#allocation2 + $0xa8] sm:$0xff]
        %v951 = vld [vmem:[#allocation2 + $0x8] sm:$0xff]
        %v952 = vld [vmem:[#allocation2 + $0x20] sm:$0xff]
        %v953 = vld [vmem:[#allocation2 + $0x38] sm:$0xff]
        %v954 = vld [vmem:[#allocation2 + $0x50] sm:$0xff]
        %v955 = vld [vmem:[#allocation2 + $0x68] sm:$0xff]
        %v956 = vld [vmem:[#allocation2 + $0x80] sm:$0xff]
        %v957 = vld [vmem:[#allocation2 + $0x98] sm:$0xff]
        %v958 = vld [vmem:[#allocation2 + $0xb0] sm:$0xff]
        %961 = vrot.lane.b32.xlu0 %v943, 96
        %v962 = vpop.permute.xlu0 %961
        %963 = vrot.lane.b32.xlu0 %v944, 96
        %v964 = vpop.permute.xlu0 %963
        %967 = vrot.lane.b32.xlu0 %v951, 96
        %v968 = vpop.permute.xlu0 %967
        %969 = vrot.lane.b32.xlu0 %v952, 96
        %v970 = vpop.permute.xlu0 %969
        %v971 = vsel %vm565, %v962, 0
        %v973 = vsel %vm565, %v964, 0
        %v975 = vsel %vm565, %v968, 0
        %v977 = vsel %vm565, %v970, 0
        %979 = vmatpush.xpose.msra.mxu0 0.0
        %980 = vmatpush.xpose.msra.mxu0 0.0
        %981 = vmatpush.xpose.msra.mxu0 0.0
        %982 = vmatpush.xpose.msra.mxu0 0.0
        %983 = vmatpush.xpose.msra.mxu0 0.0
        %984 = vmatpush.xpose.msra.mxu0 0.0
        %985 = vmatpush.xpose.msra.mxu0 0.0
        %986 = vmatpush.xpose.msra.mxu0 0.0
        %987 = vmatpush.xpose.msra.mxu0 0.0
        %988 = vmatpush.xpose.msra.mxu0 0.0
        %989 = vmatpush.xpose.msra.mxu0 0.0
        %990 = vmatpush.xpose.msra.mxu0 0.0
        %991 = vmatpush.xpose.msra.mxu0 0.0
        %992 = vmatpush.xpose.msra.mxu0 0.0
        %993 = vmatpush.xpose.msra.mxu0 %v977
        %994 = vmatpush.xpose.msra.mxu0 %v975
        %995 = vmatmul.f32.gmra.mxu0 %v971
        %v996 = vpop.f32.mrf.mxu0
        %v997 = vadd.f32 0.0, %v996
        %998 = vmatmul.f32.gmra.mxu0 %v973
        %v999 = vpop.f32.mrf.mxu0
        %v1000 = vadd.f32 0.0, %v999
        %1001 = vdwg.mxu0
        %1004 = vrot.lane.b32.xlu0 %v945, 96
        %v1005 = vpop.permute.xlu0 %1004
        %1006 = vrot.lane.b32.xlu0 %v946, 96
        %v1007 = vpop.permute.xlu0 %1006
        %1010 = vrot.lane.b32.xlu0 %v953, 96
        %v1011 = vpop.permute.xlu0 %1010
        %1012 = vrot.lane.b32.xlu0 %v954, 96
        %v1013 = vpop.permute.xlu0 %1012
        %v1014 = vsel %vm565, %v1005, 0
        %v1016 = vsel %vm565, %v1007, 0
        %v1018 = vsel %vm565, %v1011, 0
        %v1020 = vsel %vm565, %v1013, 0
        %1022 = vmatpush.xpose.msra.mxu0 0.0
        %1023 = vmatpush.xpose.msra.mxu0 0.0
        %1024 = vmatpush.xpose.msra.mxu0 0.0
        %1025 = vmatpush.xpose.msra.mxu0 0.0
        %1026 = vmatpush.xpose.msra.mxu0 0.0
        %1027 = vmatpush.xpose.msra.mxu0 0.0
        %1028 = vmatpush.xpose.msra.mxu0 0.0
        %1029 = vmatpush.xpose.msra.mxu0 0.0
        %1030 = vmatpush.xpose.msra.mxu0 0.0
        %1031 = vmatpush.xpose.msra.mxu0 0.0
        %1032 = vmatpush.xpose.msra.mxu0 0.0
        %1033 = vmatpush.xpose.msra.mxu0 0.0
        %1034 = vmatpush.xpose.msra.mxu0 0.0
        %1035 = vmatpush.xpose.msra.mxu0 0.0
        %1036 = vmatpush.xpose.msra.mxu0 %v1020
        %1037 = vmatpush.xpose.msra.mxu0 %v1018
        %1038 = vmatmul.f32.gmra.mxu0 %v1014
        %v1039 = vpop.f32.mrf.mxu0
        %v1040 = vadd.f32 0.0, %v1039
        %1041 = vmatmul.f32.gmra.mxu0 %v1016
        %v1042 = vpop.f32.mrf.mxu0
        %v1043 = vadd.f32 0.0, %v1042
        %1044 = vdwg.mxu0
        %1047 = vrot.lane.b32.xlu0 %v947, 96
        %v1048 = vpop.permute.xlu0 %1047
        %1049 = vrot.lane.b32.xlu0 %v948, 96
        %v1050 = vpop.permute.xlu0 %1049
        %1053 = vrot.lane.b32.xlu0 %v955, 96
        %v1054 = vpop.permute.xlu0 %1053
        %1055 = vrot.lane.b32.xlu0 %v956, 96
        %v1056 = vpop.permute.xlu0 %1055
        %v1057 = vsel %vm565, %v1048, 0
        %v1059 = vsel %vm565, %v1050, 0
        %v1061 = vsel %vm565, %v1054, 0
        %v1063 = vsel %vm565, %v1056, 0
        %1065 = vmatpush.xpose.msra.mxu0 0.0
        %1066 = vmatpush.xpose.msra.mxu0 0.0
        %1067 = vmatpush.xpose.msra.mxu0 0.0
        %1068 = vmatpush.xpose.msra.mxu0 0.0
        %1069 = vmatpush.xpose.msra.mxu0 0.0
        %1070 = vmatpush.xpose.msra.mxu0 0.0
        %1071 = vmatpush.xpose.msra.mxu0 0.0
        %1072 = vmatpush.xpose.msra.mxu0 0.0
        %1073 = vmatpush.xpose.msra.mxu0 0.0
        %1074 = vmatpush.xpose.msra.mxu0 0.0
        %1075 = vmatpush.xpose.msra.mxu0 0.0
        %1076 = vmatpush.xpose.msra.mxu0 0.0
        %1077 = vmatpush.xpose.msra.mxu0 0.0
        %1078 = vmatpush.xpose.msra.mxu0 0.0
        %1079 = vmatpush.xpose.msra.mxu0 %v1063
        %1080 = vmatpush.xpose.msra.mxu0 %v1061
        %1081 = vmatmul.f32.gmra.mxu0 %v1057
        %v1082 = vpop.f32.mrf.mxu0
        %v1083 = vadd.f32 0.0, %v1082
        %1084 = vmatmul.f32.gmra.mxu0 %v1059
        %v1085 = vpop.f32.mrf.mxu0
        %v1086 = vadd.f32 0.0, %v1085
        %1087 = vdwg.mxu0
        %1090 = vrot.lane.b32.xlu0 %v949, 96
        %v1091 = vpop.permute.xlu0 %1090
        %1092 = vrot.lane.b32.xlu0 %v950, 96
        %v1093 = vpop.permute.xlu0 %1092
        %1096 = vrot.lane.b32.xlu0 %v957, 96
        %v1097 = vpop.permute.xlu0 %1096
        %1098 = vrot.lane.b32.xlu0 %v958, 96
        %v1099 = vpop.permute.xlu0 %1098
        %v1100 = vsel %vm565, %v1091, 0
        %v1102 = vsel %vm565, %v1093, 0
        %v1104 = vsel %vm565, %v1097, 0
        %v1106 = vsel %vm565, %v1099, 0
        %1108 = vmatpush.xpose.msra.mxu0 0.0
        %1109 = vmatpush.xpose.msra.mxu0 0.0
        %1110 = vmatpush.xpose.msra.mxu0 0.0
        %1111 = vmatpush.xpose.msra.mxu0 0.0
        %1112 = vmatpush.xpose.msra.mxu0 0.0
        %1113 = vmatpush.xpose.msra.mxu0 0.0
        %1114 = vmatpush.xpose.msra.mxu0 0.0
        %1115 = vmatpush.xpose.msra.mxu0 0.0
        %1116 = vmatpush.xpose.msra.mxu0 0.0
        %1117 = vmatpush.xpose.msra.mxu0 0.0
        %1118 = vmatpush.xpose.msra.mxu0 0.0
        %1119 = vmatpush.xpose.msra.mxu0 0.0
        %1120 = vmatpush.xpose.msra.mxu0 0.0
        %1121 = vmatpush.xpose.msra.mxu0 0.0
        %1122 = vmatpush.xpose.msra.mxu0 %v1106
        %1123 = vmatpush.xpose.msra.mxu0 %v1104
        %1124 = vmatmul.f32.gmra.mxu0 %v1100
        %v1125 = vpop.f32.mrf.mxu0
        %v1126 = vadd.f32 0.0, %v1125
        %1127 = vmatmul.f32.gmra.mxu0 %v1102
        %v1128 = vpop.f32.mrf.mxu0
        %v1129 = vadd.f32 0.0, %v1128
        %1130 = vdwg.mxu0
        %s1131 = scalar_lea.vmem [#allocation10], 64
        %v1132 = vld [vmem:[%s1131] sm:$0xff]
        %v1133 = vld [vmem:[%s1131 + $0x8] sm:$0xff]
        %v1134 = vld [vmem:[%s1131 + $0x10] sm:$0xff]
        %v1135 = vld [vmem:[%s1131 + $0x18] sm:$0xff]
        %v1136 = vld [vmem:[%s1131 + $0x20] sm:$0xff]
        %v1137 = vld [vmem:[%s1131 + $0x28] sm:$0xff]
        %v1138 = vld [vmem:[%s1131 + $0x30] sm:$0xff]
        %v1139 = vld [vmem:[%s1131 + $0x38] sm:$0xff]
        %v1140 = vadd.f32 %v997, %v1132
        %v1141 = vadd.f32 %v1000, %v1133
        %v1142 = vadd.f32 %v1040, %v1134
        %v1143 = vadd.f32 %v1043, %v1135
        %v1144 = vadd.f32 %v1083, %v1136
        %v1145 = vadd.f32 %v1086, %v1137
        %v1146 = vadd.f32 %v1126, %v1138
        %v1147 = vadd.f32 %v1129, %v1139
        %v1148 = vsel %vm722, %v1140, -inf
        %1149 = vmax.xlane.f32.xlu0 %v1148
        %v1150 = vpop.xlane.xlu0 %1149
        %v1151 = vsel %vm722, %v1141, -inf
        %1152 = vmax.xlane.f32.xlu0 %v1151
        %v1153 = vpop.xlane.xlu0 %1152
        %v1154 = vsel %vm722, %v1142, -inf
        %1155 = vmax.xlane.f32.xlu0 %v1154
        %v1156 = vpop.xlane.xlu0 %1155
        %v1157 = vsel %vm722, %v1143, -inf
        %1158 = vmax.xlane.f32.xlu0 %v1157
        %v1159 = vpop.xlane.xlu0 %1158
        %v1160 = vsel %vm722, %v1144, -inf
        %1161 = vmax.xlane.f32.xlu0 %v1160
        %v1162 = vpop.xlane.xlu0 %1161
        %v1163 = vsel %vm722, %v1145, -inf
        %1164 = vmax.xlane.f32.xlu0 %v1163
        %v1165 = vpop.xlane.xlu0 %1164
        %v1166 = vsel %vm722, %v1146, -inf
        %1167 = vmax.xlane.f32.xlu0 %v1166
        %v1168 = vpop.xlane.xlu0 %1167
        %v1169 = vsel %vm722, %v1147, -inf
        %1170 = vmax.xlane.f32.xlu0 %v1169
        %v1171 = vpop.xlane.xlu0 %1170
        %v1172 = vsub.f32 %v1140, %v1150
        %v1173 = vsub.f32 %v1141, %v1153
        %v1174 = vsub.f32 %v1142, %v1156
        %v1175 = vsub.f32 %v1143, %v1159
        %v1176 = vsub.f32 %v1144, %v1162
        %v1177 = vsub.f32 %v1145, %v1165
        %v1178 = vsub.f32 %v1146, %v1168
        %v1179 = vsub.f32 %v1147, %v1171
        %v1180 = vmul.f32 %v1172, 1.442695
        %v1181 = vpow.pop %v1180
        %v1182 = vmul.f32 %v1173, 1.442695
        %v1183 = vpow.pop %v1182
        %v1184 = vmul.f32 %v1174, 1.442695
        %v1185 = vpow.pop %v1184
        %v1186 = vmul.f32 %v1175, 1.442695
        %v1187 = vpow.pop %v1186
        %v1188 = vmul.f32 %v1176, 1.442695
        %v1189 = vpow.pop %v1188
        %v1190 = vmul.f32 %v1177, 1.442695
        %v1191 = vpow.pop %v1190
        %v1192 = vmul.f32 %v1178, 1.442695
        %v1193 = vpow.pop %v1192
        %v1194 = vmul.f32 %v1179, 1.442695
        %v1195 = vpow.pop %v1194
        %v1196 = vsel %vm722, %v1181, 0.0
        %1197 = vadd.xlane.f32.xlu0 %v1196
        %v1198 = vpop.xlane.xlu0 %1197
        %v1199 = vsel %vm722, %v1183, 0.0
        %1200 = vadd.xlane.f32.xlu0 %v1199
        %v1201 = vpop.xlane.xlu0 %1200
        %v1202 = vsel %vm722, %v1185, 0.0
        %1203 = vadd.xlane.f32.xlu0 %v1202
        %v1204 = vpop.xlane.xlu0 %1203
        %v1205 = vsel %vm722, %v1187, 0.0
        %1206 = vadd.xlane.f32.xlu0 %v1205
        %v1207 = vpop.xlane.xlu0 %1206
        %v1208 = vsel %vm722, %v1189, 0.0
        %1209 = vadd.xlane.f32.xlu0 %v1208
        %v1210 = vpop.xlane.xlu0 %1209
        %v1211 = vsel %vm722, %v1191, 0.0
        %1212 = vadd.xlane.f32.xlu0 %v1211
        %v1213 = vpop.xlane.xlu0 %1212
        %v1214 = vsel %vm722, %v1193, 0.0
        %1215 = vadd.xlane.f32.xlu0 %v1214
        %v1216 = vpop.xlane.xlu0 %1215
        %v1217 = vsel %vm722, %v1195, 0.0
        %1218 = vadd.xlane.f32.xlu0 %v1217
        %v1219 = vpop.xlane.xlu0 %1218
        %v1220 = vld [vmem:[#allocation2 + $0x10] sm:$0xff]
        %v1221 = vld [vmem:[#allocation2 + $0x28] sm:$0xff]
        %v1222 = vld [vmem:[#allocation2 + $0x40] sm:$0xff]
        %v1223 = vld [vmem:[#allocation2 + $0x58] sm:$0xff]
        %v1224 = vld [vmem:[#allocation2 + $0x70] sm:$0xff]
        %v1225 = vld [vmem:[#allocation2 + $0x88] sm:$0xff]
        %v1226 = vld [vmem:[#allocation2 + $0xa0] sm:$0xff]
        %v1227 = vld [vmem:[#allocation2 + $0xb8] sm:$0xff]
        %1230 = vrot.lane.b32.xlu0 %v1220, 96
        %v1231 = vpop.permute.xlu0 %1230
        %1232 = vrot.lane.b32.xlu0 %v1221, 96
        %v1233 = vpop.permute.xlu0 %1232
        %v1237 = vsel %vm722, %v1181, 0
        %v1240 = vsel %vm722, %v1183, 0
        %1242 = vmatpush.msra.mxu0 0.0
        %1243 = vmatpush.msra.mxu0 0.0
        %1244 = vmatpush.msra.mxu0 0.0
        %1245 = vmatpush.msra.mxu0 0.0
        %1246 = vmatpush.msra.mxu0 0.0
        %1247 = vmatpush.msra.mxu0 0.0
        %1248 = vmatpush.msra.mxu0 0.0
        %1249 = vmatpush.msra.mxu0 0.0
        %1250 = vmatpush.msra.mxu0 0.0
        %1251 = vmatpush.msra.mxu0 0.0
        %1252 = vmatpush.msra.mxu0 0.0
        %1253 = vmatpush.msra.mxu0 0.0
        %1254 = vmatpush.msra.mxu0 0.0
        %1255 = vmatpush.msra.mxu0 0.0
        %1256 = vmatpush.msra.mxu0 %v1233
        %1257 = vmatpush.msra.mxu0 %v1231
        %1258 = vmatmul.f32.gmra.mxu0 %v1237
        %v1259 = vpop.f32.mrf.mxu0
        %v1260 = vadd.f32 0.0, %v1259
        %1261 = vmatmul.f32.gmra.mxu0 %v1240
        %v1262 = vpop.f32.mrf.mxu0
        %v1263 = vadd.f32 0.0, %v1262
        %1264 = vdwg.mxu0
        %1267 = vrot.lane.b32.xlu0 %v1222, 96
        %v1268 = vpop.permute.xlu0 %1267
        %1269 = vrot.lane.b32.xlu0 %v1223, 96
        %v1270 = vpop.permute.xlu0 %1269
        %v1274 = vsel %vm722, %v1185, 0
        %v1277 = vsel %vm722, %v1187, 0
        %1279 = vmatpush.msra.mxu0 0.0
        %1280 = vmatpush.msra.mxu0 0.0
        %1281 = vmatpush.msra.mxu0 0.0
        %1282 = vmatpush.msra.mxu0 0.0
        %1283 = vmatpush.msra.mxu0 0.0
        %1284 = vmatpush.msra.mxu0 0.0
        %1285 = vmatpush.msra.mxu0 0.0
        %1286 = vmatpush.msra.mxu0 0.0
        %1287 = vmatpush.msra.mxu0 0.0
        %1288 = vmatpush.msra.mxu0 0.0
        %1289 = vmatpush.msra.mxu0 0.0
        %1290 = vmatpush.msra.mxu0 0.0
        %1291 = vmatpush.msra.mxu0 0.0
        %1292 = vmatpush.msra.mxu0 0.0
        %1293 = vmatpush.msra.mxu0 %v1270
        %1294 = vmatpush.msra.mxu0 %v1268
        %1295 = vmatmul.f32.gmra.mxu0 %v1274
        %v1296 = vpop.f32.mrf.mxu0
        %v1297 = vadd.f32 0.0, %v1296
        %1298 = vmatmul.f32.gmra.mxu0 %v1277
        %v1299 = vpop.f32.mrf.mxu0
        %v1300 = vadd.f32 0.0, %v1299
        %1301 = vdwg.mxu0
        %1304 = vrot.lane.b32.xlu0 %v1224, 96
        %v1305 = vpop.permute.xlu0 %1304
        %1306 = vrot.lane.b32.xlu0 %v1225, 96
        %v1307 = vpop.permute.xlu0 %1306
        %v1311 = vsel %vm722, %v1189, 0
        %v1314 = vsel %vm722, %v1191, 0
        %1316 = vmatpush.msra.mxu0 0.0
        %1317 = vmatpush.msra.mxu0 0.0
        %1318 = vmatpush.msra.mxu0 0.0
        %1319 = vmatpush.msra.mxu0 0.0
        %1320 = vmatpush.msra.mxu0 0.0
        %1321 = vmatpush.msra.mxu0 0.0
        %1322 = vmatpush.msra.mxu0 0.0
        %1323 = vmatpush.msra.mxu0 0.0
        %1324 = vmatpush.msra.mxu0 0.0
        %1325 = vmatpush.msra.mxu0 0.0
        %1326 = vmatpush.msra.mxu0 0.0
        %1327 = vmatpush.msra.mxu0 0.0
        %1328 = vmatpush.msra.mxu0 0.0
        %1329 = vmatpush.msra.mxu0 0.0
        %1330 = vmatpush.msra.mxu0 %v1307
        %1331 = vmatpush.msra.mxu0 %v1305
        %1332 = vmatmul.f32.gmra.mxu0 %v1311
        %v1333 = vpop.f32.mrf.mxu0
        %v1334 = vadd.f32 0.0, %v1333
        %1335 = vmatmul.f32.gmra.mxu0 %v1314
        %v1336 = vpop.f32.mrf.mxu0
        %v1337 = vadd.f32 0.0, %v1336
        %1338 = vdwg.mxu0
        %1341 = vrot.lane.b32.xlu0 %v1226, 96
        %v1342 = vpop.permute.xlu0 %1341
        %1343 = vrot.lane.b32.xlu0 %v1227, 96
        %v1344 = vpop.permute.xlu0 %1343
        %v1348 = vsel %vm722, %v1193, 0
        %v1351 = vsel %vm722, %v1195, 0
        %1353 = vmatpush.msra.mxu0 0.0
        %1354 = vmatpush.msra.mxu0 0.0
        %1355 = vmatpush.msra.mxu0 0.0
        %1356 = vmatpush.msra.mxu0 0.0
        %1357 = vmatpush.msra.mxu0 0.0
        %1358 = vmatpush.msra.mxu0 0.0
        %1359 = vmatpush.msra.mxu0 0.0
        %1360 = vmatpush.msra.mxu0 0.0
        %1361 = vmatpush.msra.mxu0 0.0
        %1362 = vmatpush.msra.mxu0 0.0
        %1363 = vmatpush.msra.mxu0 0.0
        %1364 = vmatpush.msra.mxu0 0.0
        %1365 = vmatpush.msra.mxu0 0.0
        %1366 = vmatpush.msra.mxu0 0.0
        %1367 = vmatpush.msra.mxu0 %v1344
        %1368 = vmatpush.msra.mxu0 %v1342
        %1369 = vmatmul.f32.gmra.mxu0 %v1348
        %v1370 = vpop.f32.mrf.mxu0
        %v1371 = vadd.f32 0.0, %v1370
        %1372 = vmatmul.f32.gmra.mxu0 %v1351
        %v1373 = vpop.f32.mrf.mxu0
        %v1374 = vadd.f32 0.0, %v1373
        %1375 = vdwg.mxu0
        %v1376 = vrcp.pop %v1198
        %v1377 = vrcp.pop %v1201
        %v1378 = vrcp.pop %v1204
        %v1379 = vrcp.pop %v1207
        %v1380 = vrcp.pop %v1210
        %v1381 = vrcp.pop %v1213
        %v1382 = vrcp.pop %v1216
        %v1383 = vrcp.pop %v1219
        %v1384 = vmul.f32 %v1260, %v1376
        %v1385 = vmul.f32 %v1263, %v1377
        %v1386 = vmul.f32 %v1297, %v1378
        %v1387 = vmul.f32 %v1300, %v1379
        %v1388 = vmul.f32 %v1334, %v1380
        %v1389 = vmul.f32 %v1337, %v1381
        %v1390 = vmul.f32 %v1371, %v1382
        %v1391 = vmul.f32 %v1374, %v1383
        %1400 = vrot.lane.b32.xlu0 %v1384, 32
        %v1401 = vpop.permute.xlu0 %1400
        %1402 = vrot.lane.b32.xlu0 %v1385, 32
        %v1403 = vpop.permute.xlu0 %1402
        %1404 = vrot.lane.b32.xlu0 %v1386, 32
        %v1405 = vpop.permute.xlu0 %1404
        %1406 = vrot.lane.b32.xlu0 %v1387, 32
        %v1407 = vpop.permute.xlu0 %1406
        %1408 = vrot.lane.b32.xlu0 %v1388, 32
        %v1409 = vpop.permute.xlu0 %1408
        %1410 = vrot.lane.b32.xlu0 %v1389, 32
        %v1411 = vpop.permute.xlu0 %1410
        %1412 = vrot.lane.b32.xlu0 %v1390, 32
        %v1413 = vpop.permute.xlu0 %1412
        %1414 = vrot.lane.b32.xlu0 %v1391, 32
        %v1415 = vpop.permute.xlu0 %1414
        %vm1424 = vcmask 523520
        %1425 = vst.msk [vmem:[#allocation3] sm:$0xff] %vm1424, %v1401
        %1426 = vst.msk [vmem:[#allocation3 + $0x8] sm:$0xff] %vm1424, %v1403
        %1427 = vst.msk [vmem:[#allocation3 + $0x10] sm:$0xff] %vm1424, %v1405
        %1428 = vst.msk [vmem:[#allocation3 + $0x18] sm:$0xff] %vm1424, %v1407
        %1429 = vst.msk [vmem:[#allocation3 + $0x20] sm:$0xff] %vm1424, %v1409
        %1430 = vst.msk [vmem:[#allocation3 + $0x28] sm:$0xff] %vm1424, %v1411
        %1431 = vst.msk [vmem:[#allocation3 + $0x30] sm:$0xff] %vm1424, %v1413
        %1432 = vst.msk [vmem:[#allocation3 + $0x38] sm:$0xff] %vm1424, %v1415
        %v1433 = vld [vmem:[#allocation2] sm:$0xff]
        %v1434 = vld [vmem:[#allocation2 + $0x18] sm:$0xff]
        %v1435 = vld [vmem:[#allocation2 + $0x30] sm:$0xff]
        %v1436 = vld [vmem:[#allocation2 + $0x48] sm:$0xff]
        %v1437 = vld [vmem:[#allocation2 + $0x60] sm:$0xff]
        %v1438 = vld [vmem:[#allocation2 + $0x78] sm:$0xff]
        %v1439 = vld [vmem:[#allocation2 + $0x90] sm:$0xff]
        %v1440 = vld [vmem:[#allocation2 + $0xa8] sm:$0xff]
        %v1441 = vld [vmem:[#allocation2 + $0x8] sm:$0xff]
        %v1442 = vld [vmem:[#allocation2 + $0x20] sm:$0xff]
        %v1443 = vld [vmem:[#allocation2 + $0x38] sm:$0xff]
        %v1444 = vld [vmem:[#allocation2 + $0x50] sm:$0xff]
        %v1445 = vld [vmem:[#allocation2 + $0x68] sm:$0xff]
        %v1446 = vld [vmem:[#allocation2 + $0x80] sm:$0xff]
        %v1447 = vld [vmem:[#allocation2 + $0x98] sm:$0xff]
        %v1448 = vld [vmem:[#allocation2 + $0xb0] sm:$0xff]
        %1451 = vrot.lane.b32.xlu0 %v1433, 64
        %v1452 = vpop.permute.xlu0 %1451
        %1453 = vrot.lane.b32.xlu0 %v1434, 64
        %v1454 = vpop.permute.xlu0 %1453
        %1457 = vrot.lane.b32.xlu0 %v1441, 64
        %v1458 = vpop.permute.xlu0 %1457
        %1459 = vrot.lane.b32.xlu0 %v1442, 64
        %v1460 = vpop.permute.xlu0 %1459
        %v1461 = vsel %vm565, %v1452, 0
        %v1463 = vsel %vm565, %v1454, 0
        %v1465 = vsel %vm565, %v1458, 0
        %v1467 = vsel %vm565, %v1460, 0
        %1469 = vmatpush.xpose.msra.mxu0 0.0
        %1470 = vmatpush.xpose.msra.mxu0 0.0
        %1471 = vmatpush.xpose.msra.mxu0 0.0
        %1472 = vmatpush.xpose.msra.mxu0 0.0
        %1473 = vmatpush.xpose.msra.mxu0 0.0
        %1474 = vmatpush.xpose.msra.mxu0 0.0
        %1475 = vmatpush.xpose.msra.mxu0 0.0
        %1476 = vmatpush.xpose.msra.mxu0 0.0
        %1477 = vmatpush.xpose.msra.mxu0 0.0
        %1478 = vmatpush.xpose.msra.mxu0 0.0
        %1479 = vmatpush.xpose.msra.mxu0 0.0
        %1480 = vmatpush.xpose.msra.mxu0 0.0
        %1481 = vmatpush.xpose.msra.mxu0 0.0
        %1482 = vmatpush.xpose.msra.mxu0 0.0
        %1483 = vmatpush.xpose.msra.mxu0 %v1467
        %1484 = vmatpush.xpose.msra.mxu0 %v1465
        %1485 = vmatmul.f32.gmra.mxu0 %v1461
        %v1486 = vpop.f32.mrf.mxu0
        %v1487 = vadd.f32 0.0, %v1486
        %1488 = vmatmul.f32.gmra.mxu0 %v1463
        %v1489 = vpop.f32.mrf.mxu0
        %v1490 = vadd.f32 0.0, %v1489
        %1491 = vdwg.mxu0
        %1494 = vrot.lane.b32.xlu0 %v1435, 64
        %v1495 = vpop.permute.xlu0 %1494
        %1496 = vrot.lane.b32.xlu0 %v1436, 64
        %v1497 = vpop.permute.xlu0 %1496
        %1500 = vrot.lane.b32.xlu0 %v1443, 64
        %v1501 = vpop.permute.xlu0 %1500
        %1502 = vrot.lane.b32.xlu0 %v1444, 64
        %v1503 = vpop.permute.xlu0 %1502
        %v1504 = vsel %vm565, %v1495, 0
        %v1506 = vsel %vm565, %v1497, 0
        %v1508 = vsel %vm565, %v1501, 0
        %v1510 = vsel %vm565, %v1503, 0
        %1512 = vmatpush.xpose.msra.mxu0 0.0
        %1513 = vmatpush.xpose.msra.mxu0 0.0
        %1514 = vmatpush.xpose.msra.mxu0 0.0
        %1515 = vmatpush.xpose.msra.mxu0 0.0
        %1516 = vmatpush.xpose.msra.mxu0 0.0
        %1517 = vmatpush.xpose.msra.mxu0 0.0
        %1518 = vmatpush.xpose.msra.mxu0 0.0
        %1519 = vmatpush.xpose.msra.mxu0 0.0
        %1520 = vmatpush.xpose.msra.mxu0 0.0
        %1521 = vmatpush.xpose.msra.mxu0 0.0
        %1522 = vmatpush.xpose.msra.mxu0 0.0
        %1523 = vmatpush.xpose.msra.mxu0 0.0
        %1524 = vmatpush.xpose.msra.mxu0 0.0
        %1525 = vmatpush.xpose.msra.mxu0 0.0
        %1526 = vmatpush.xpose.msra.mxu0 %v1510
        %1527 = vmatpush.xpose.msra.mxu0 %v1508
        %1528 = vmatmul.f32.gmra.mxu0 %v1504
        %v1529 = vpop.f32.mrf.mxu0
        %v1530 = vadd.f32 0.0, %v1529
        %1531 = vmatmul.f32.gmra.mxu0 %v1506
        %v1532 = vpop.f32.mrf.mxu0
        %v1533 = vadd.f32 0.0, %v1532
        %1534 = vdwg.mxu0
        %1537 = vrot.lane.b32.xlu0 %v1437, 64
        %v1538 = vpop.permute.xlu0 %1537
        %1539 = vrot.lane.b32.xlu0 %v1438, 64
        %v1540 = vpop.permute.xlu0 %1539
        %1543 = vrot.lane.b32.xlu0 %v1445, 64
        %v1544 = vpop.permute.xlu0 %1543
        %1545 = vrot.lane.b32.xlu0 %v1446, 64
        %v1546 = vpop.permute.xlu0 %1545
        %v1547 = vsel %vm565, %v1538, 0
        %v1549 = vsel %vm565, %v1540, 0
        %v1551 = vsel %vm565, %v1544, 0
        %v1553 = vsel %vm565, %v1546, 0
        %1555 = vmatpush.xpose.msra.mxu0 0.0
        %1556 = vmatpush.xpose.msra.mxu0 0.0
        %1557 = vmatpush.xpose.msra.mxu0 0.0
        %1558 = vmatpush.xpose.msra.mxu0 0.0
        %1559 = vmatpush.xpose.msra.mxu0 0.0
        %1560 = vmatpush.xpose.msra.mxu0 0.0
        %1561 = vmatpush.xpose.msra.mxu0 0.0
        %1562 = vmatpush.xpose.msra.mxu0 0.0
        %1563 = vmatpush.xpose.msra.mxu0 0.0
        %1564 = vmatpush.xpose.msra.mxu0 0.0
        %1565 = vmatpush.xpose.msra.mxu0 0.0
        %1566 = vmatpush.xpose.msra.mxu0 0.0
        %1567 = vmatpush.xpose.msra.mxu0 0.0
        %1568 = vmatpush.xpose.msra.mxu0 0.0
        %1569 = vmatpush.xpose.msra.mxu0 %v1553
        %1570 = vmatpush.xpose.msra.mxu0 %v1551
        %1571 = vmatmul.f32.gmra.mxu0 %v1547
        %v1572 = vpop.f32.mrf.mxu0
        %v1573 = vadd.f32 0.0, %v1572
        %1574 = vmatmul.f32.gmra.mxu0 %v1549
        %v1575 = vpop.f32.mrf.mxu0
        %v1576 = vadd.f32 0.0, %v1575
        %1577 = vdwg.mxu0
        %1580 = vrot.lane.b32.xlu0 %v1439, 64
        %v1581 = vpop.permute.xlu0 %1580
        %1582 = vrot.lane.b32.xlu0 %v1440, 64
        %v1583 = vpop.permute.xlu0 %1582
        %1586 = vrot.lane.b32.xlu0 %v1447, 64
        %v1587 = vpop.permute.xlu0 %1586
        %1588 = vrot.lane.b32.xlu0 %v1448, 64
        %v1589 = vpop.permute.xlu0 %1588
        %v1590 = vsel %vm565, %v1581, 0
        %v1592 = vsel %vm565, %v1583, 0
        %v1594 = vsel %vm565, %v1587, 0
        %v1596 = vsel %vm565, %v1589, 0
        %1598 = vmatpush.xpose.msra.mxu0 0.0
        %1599 = vmatpush.xpose.msra.mxu0 0.0
        %1600 = vmatpush.xpose.msra.mxu0 0.0
        %1601 = vmatpush.xpose.msra.mxu0 0.0
        %1602 = vmatpush.xpose.msra.mxu0 0.0
        %1603 = vmatpush.xpose.msra.mxu0 0.0
        %1604 = vmatpush.xpose.msra.mxu0 0.0
        %1605 = vmatpush.xpose.msra.mxu0 0.0
        %1606 = vmatpush.xpose.msra.mxu0 0.0
        %1607 = vmatpush.xpose.msra.mxu0 0.0
        %1608 = vmatpush.xpose.msra.mxu0 0.0
        %1609 = vmatpush.xpose.msra.mxu0 0.0
        %1610 = vmatpush.xpose.msra.mxu0 0.0
        %1611 = vmatpush.xpose.msra.mxu0 0.0
        %1612 = vmatpush.xpose.msra.mxu0 %v1596
        %1613 = vmatpush.xpose.msra.mxu0 %v1594
        %1614 = vmatmul.f32.gmra.mxu0 %v1590
        %v1615 = vpop.f32.mrf.mxu0
        %v1616 = vadd.f32 0.0, %v1615
        %1617 = vmatmul.f32.gmra.mxu0 %v1592
        %v1618 = vpop.f32.mrf.mxu0
        %v1619 = vadd.f32 0.0, %v1618
        %1620 = vdwg.mxu0
        %s1621 = scalar_lea.vmem [#allocation10], 128
        %v1622 = vld [vmem:[%s1621] sm:$0xff]
        %v1623 = vld [vmem:[%s1621 + $0x8] sm:$0xff]
        %v1624 = vld [vmem:[%s1621 + $0x10] sm:$0xff]
        %v1625 = vld [vmem:[%s1621 + $0x18] sm:$0xff]
        %v1626 = vld [vmem:[%s1621 + $0x20] sm:$0xff]
        %v1627 = vld [vmem:[%s1621 + $0x28] sm:$0xff]
        %v1628 = vld [vmem:[%s1621 + $0x30] sm:$0xff]
        %v1629 = vld [vmem:[%s1621 + $0x38] sm:$0xff]
        %v1630 = vadd.f32 %v1487, %v1622
        %v1631 = vadd.f32 %v1490, %v1623
        %v1632 = vadd.f32 %v1530, %v1624
        %v1633 = vadd.f32 %v1533, %v1625
        %v1634 = vadd.f32 %v1573, %v1626
        %v1635 = vadd.f32 %v1576, %v1627
        %v1636 = vadd.f32 %v1616, %v1628
        %v1637 = vadd.f32 %v1619, %v1629
        %v1638 = vsel %vm722, %v1630, -inf
        %1639 = vmax.xlane.f32.xlu0 %v1638
        %v1640 = vpop.xlane.xlu0 %1639
        %v1641 = vsel %vm722, %v1631, -inf
        %1642 = vmax.xlane.f32.xlu0 %v1641
        %v1643 = vpop.xlane.xlu0 %1642
        %v1644 = vsel %vm722, %v1632, -inf
        %1645 = vmax.xlane.f32.xlu0 %v1644
        %v1646 = vpop.xlane.xlu0 %1645
        %v1647 = vsel %vm722, %v1633, -inf
        %1648 = vmax.xlane.f32.xlu0 %v1647
        %v1649 = vpop.xlane.xlu0 %1648
        %v1650 = vsel %vm722, %v1634, -inf
        %1651 = vmax.xlane.f32.xlu0 %v1650
        %v1652 = vpop.xlane.xlu0 %1651
        %v1653 = vsel %vm722, %v1635, -inf
        %1654 = vmax.xlane.f32.xlu0 %v1653
        %v1655 = vpop.xlane.xlu0 %1654
        %v1656 = vsel %vm722, %v1636, -inf
        %1657 = vmax.xlane.f32.xlu0 %v1656
        %v1658 = vpop.xlane.xlu0 %1657
        %v1659 = vsel %vm722, %v1637, -inf
        %1660 = vmax.xlane.f32.xlu0 %v1659
        %v1661 = vpop.xlane.xlu0 %1660
        %v1662 = vsub.f32 %v1630, %v1640
        %v1663 = vsub.f32 %v1631, %v1643
        %v1664 = vsub.f32 %v1632, %v1646
        %v1665 = vsub.f32 %v1633, %v1649
        %v1666 = vsub.f32 %v1634, %v1652
        %v1667 = vsub.f32 %v1635, %v1655
        %v1668 = vsub.f32 %v1636, %v1658
        %v1669 = vsub.f32 %v1637, %v1661
        %v1670 = vmul.f32 %v1662, 1.442695
        %v1671 = vpow.pop %v1670
        %v1672 = vmul.f32 %v1663, 1.442695
        %v1673 = vpow.pop %v1672
        %v1674 = vmul.f32 %v1664, 1.442695
        %v1675 = vpow.pop %v1674
        %v1676 = vmul.f32 %v1665, 1.442695
        %v1677 = vpow.pop %v1676
        %v1678 = vmul.f32 %v1666, 1.442695
        %v1679 = vpow.pop %v1678
        %v1680 = vmul.f32 %v1667, 1.442695
        %v1681 = vpow.pop %v1680
        %v1682 = vmul.f32 %v1668, 1.442695
        %v1683 = vpow.pop %v1682
        %v1684 = vmul.f32 %v1669, 1.442695
        %v1685 = vpow.pop %v1684
        %v1686 = vsel %vm722, %v1671, 0.0
        %1687 = vadd.xlane.f32.xlu0 %v1686
        %v1688 = vpop.xlane.xlu0 %1687
        %v1689 = vsel %vm722, %v1673, 0.0
        %1690 = vadd.xlane.f32.xlu0 %v1689
        %v1691 = vpop.xlane.xlu0 %1690
        %v1692 = vsel %vm722, %v1675, 0.0
        %1693 = vadd.xlane.f32.xlu0 %v1692
        %v1694 = vpop.xlane.xlu0 %1693
        %v1695 = vsel %vm722, %v1677, 0.0
        %1696 = vadd.xlane.f32.xlu0 %v1695
        %v1697 = vpop.xlane.xlu0 %1696
        %v1698 = vsel %vm722, %v1679, 0.0
        %1699 = vadd.xlane.f32.xlu0 %v1698
        %v1700 = vpop.xlane.xlu0 %1699
        %v1701 = vsel %vm722, %v1681, 0.0
        %1702 = vadd.xlane.f32.xlu0 %v1701
        %v1703 = vpop.xlane.xlu0 %1702
        %v1704 = vsel %vm722, %v1683, 0.0
        %1705 = vadd.xlane.f32.xlu0 %v1704
        %v1706 = vpop.xlane.xlu0 %1705
        %v1707 = vsel %vm722, %v1685, 0.0
        %1708 = vadd.xlane.f32.xlu0 %v1707
        %v1709 = vpop.xlane.xlu0 %1708
        %v1710 = vld [vmem:[#allocation2 + $0x10] sm:$0xff]
        %v1711 = vld [vmem:[#allocation2 + $0x28] sm:$0xff]
        %v1712 = vld [vmem:[#allocation2 + $0x40] sm:$0xff]
        %v1713 = vld [vmem:[#allocation2 + $0x58] sm:$0xff]
        %v1714 = vld [vmem:[#allocation2 + $0x70] sm:$0xff]
        %v1715 = vld [vmem:[#allocation2 + $0x88] sm:$0xff]
        %v1716 = vld [vmem:[#allocation2 + $0xa0] sm:$0xff]
        %v1717 = vld [vmem:[#allocation2 + $0xb8] sm:$0xff]
        %1720 = vrot.lane.b32.xlu0 %v1710, 64
        %v1721 = vpop.permute.xlu0 %1720
        %1722 = vrot.lane.b32.xlu0 %v1711, 64
        %v1723 = vpop.permute.xlu0 %1722
        %v1727 = vsel %vm722, %v1671, 0
        %v1730 = vsel %vm722, %v1673, 0
        %1732 = vmatpush.msra.mxu0 0.0
        %1733 = vmatpush.msra.mxu0 0.0
        %1734 = vmatpush.msra.mxu0 0.0
        %1735 = vmatpush.msra.mxu0 0.0
        %1736 = vmatpush.msra.mxu0 0.0
        %1737 = vmatpush.msra.mxu0 0.0
        %1738 = vmatpush.msra.mxu0 0.0
        %1739 = vmatpush.msra.mxu0 0.0
        %1740 = vmatpush.msra.mxu0 0.0
        %1741 = vmatpush.msra.mxu0 0.0
        %1742 = vmatpush.msra.mxu0 0.0
        %1743 = vmatpush.msra.mxu0 0.0
        %1744 = vmatpush.msra.mxu0 0.0
        %1745 = vmatpush.msra.mxu0 0.0
        %1746 = vmatpush.msra.mxu0 %v1723
        %1747 = vmatpush.msra.mxu0 %v1721
        %1748 = vmatmul.f32.gmra.mxu0 %v1727
        %v1749 = vpop.f32.mrf.mxu0
        %v1750 = vadd.f32 0.0, %v1749
        %1751 = vmatmul.f32.gmra.mxu0 %v1730
        %v1752 = vpop.f32.mrf.mxu0
        %v1753 = vadd.f32 0.0, %v1752
        %1754 = vdwg.mxu0
        %1757 = vrot.lane.b32.xlu0 %v1712, 64
        %v1758 = vpop.permute.xlu0 %1757
        %1759 = vrot.lane.b32.xlu0 %v1713, 64
        %v1760 = vpop.permute.xlu0 %1759
        %v1764 = vsel %vm722, %v1675, 0
        %v1767 = vsel %vm722, %v1677, 0
        %1769 = vmatpush.msra.mxu0 0.0
        %1770 = vmatpush.msra.mxu0 0.0
        %1771 = vmatpush.msra.mxu0 0.0
        %1772 = vmatpush.msra.mxu0 0.0
        %1773 = vmatpush.msra.mxu0 0.0
        %1774 = vmatpush.msra.mxu0 0.0
        %1775 = vmatpush.msra.mxu0 0.0
        %1776 = vmatpush.msra.mxu0 0.0
        %1777 = vmatpush.msra.mxu0 0.0
        %1778 = vmatpush.msra.mxu0 0.0
        %1779 = vmatpush.msra.mxu0 0.0
        %1780 = vmatpush.msra.mxu0 0.0
        %1781 = vmatpush.msra.mxu0 0.0
        %1782 = vmatpush.msra.mxu0 0.0
        %1783 = vmatpush.msra.mxu0 %v1760
        %1784 = vmatpush.msra.mxu0 %v1758
        %1785 = vmatmul.f32.gmra.mxu0 %v1764
        %v1786 = vpop.f32.mrf.mxu0
        %v1787 = vadd.f32 0.0, %v1786
        %1788 = vmatmul.f32.gmra.mxu0 %v1767
        %v1789 = vpop.f32.mrf.mxu0
        %v1790 = vadd.f32 0.0, %v1789
        %1791 = vdwg.mxu0
        %1794 = vrot.lane.b32.xlu0 %v1714, 64
        %v1795 = vpop.permute.xlu0 %1794
        %1796 = vrot.lane.b32.xlu0 %v1715, 64
        %v1797 = vpop.permute.xlu0 %1796
        %v1801 = vsel %vm722, %v1679, 0
        %v1804 = vsel %vm722, %v1681, 0
        %1806 = vmatpush.msra.mxu0 0.0
        %1807 = vmatpush.msra.mxu0 0.0
        %1808 = vmatpush.msra.mxu0 0.0
        %1809 = vmatpush.msra.mxu0 0.0
        %1810 = vmatpush.msra.mxu0 0.0
        %1811 = vmatpush.msra.mxu0 0.0
        %1812 = vmatpush.msra.mxu0 0.0
        %1813 = vmatpush.msra.mxu0 0.0
        %1814 = vmatpush.msra.mxu0 0.0
        %1815 = vmatpush.msra.mxu0 0.0
        %1816 = vmatpush.msra.mxu0 0.0
        %1817 = vmatpush.msra.mxu0 0.0
        %1818 = vmatpush.msra.mxu0 0.0
        %1819 = vmatpush.msra.mxu0 0.0
        %1820 = vmatpush.msra.mxu0 %v1797
        %1821 = vmatpush.msra.mxu0 %v1795
        %1822 = vmatmul.f32.gmra.mxu0 %v1801
        %v1823 = vpop.f32.mrf.mxu0
        %v1824 = vadd.f32 0.0, %v1823
        %1825 = vmatmul.f32.gmra.mxu0 %v1804
        %v1826 = vpop.f32.mrf.mxu0
        %v1827 = vadd.f32 0.0, %v1826
        %1828 = vdwg.mxu0
        %1831 = vrot.lane.b32.xlu0 %v1716, 64
        %v1832 = vpop.permute.xlu0 %1831
        %1833 = vrot.lane.b32.xlu0 %v1717, 64
        %v1834 = vpop.permute.xlu0 %1833
        %v1838 = vsel %vm722, %v1683, 0
        %v1841 = vsel %vm722, %v1685, 0
        %1843 = vmatpush.msra.mxu0 0.0
        %1844 = vmatpush.msra.mxu0 0.0
        %1845 = vmatpush.msra.mxu0 0.0
        %1846 = vmatpush.msra.mxu0 0.0
        %1847 = vmatpush.msra.mxu0 0.0
        %1848 = vmatpush.msra.mxu0 0.0
        %1849 = vmatpush.msra.mxu0 0.0
        %1850 = vmatpush.msra.mxu0 0.0
        %1851 = vmatpush.msra.mxu0 0.0
        %1852 = vmatpush.msra.mxu0 0.0
        %1853 = vmatpush.msra.mxu0 0.0
        %1854 = vmatpush.msra.mxu0 0.0
        %1855 = vmatpush.msra.mxu0 0.0
        %1856 = vmatpush.msra.mxu0 0.0
        %1857 = vmatpush.msra.mxu0 %v1834
        %1858 = vmatpush.msra.mxu0 %v1832
        %1859 = vmatmul.f32.gmra.mxu0 %v1838
        %v1860 = vpop.f32.mrf.mxu0
        %v1861 = vadd.f32 0.0, %v1860
        %1862 = vmatmul.f32.gmra.mxu0 %v1841
        %v1863 = vpop.f32.mrf.mxu0
        %v1864 = vadd.f32 0.0, %v1863
        %1865 = vdwg.mxu0
        %v1866 = vrcp.pop %v1688
        %v1867 = vrcp.pop %v1691
        %v1868 = vrcp.pop %v1694
        %v1869 = vrcp.pop %v1697
        %v1870 = vrcp.pop %v1700
        %v1871 = vrcp.pop %v1703
        %v1872 = vrcp.pop %v1706
        %v1873 = vrcp.pop %v1709
        %v1874 = vmul.f32 %v1750, %v1866
        %v1875 = vmul.f32 %v1753, %v1867
        %v1876 = vmul.f32 %v1787, %v1868
        %v1877 = vmul.f32 %v1790, %v1869
        %v1878 = vmul.f32 %v1824, %v1870
        %v1879 = vmul.f32 %v1827, %v1871
        %v1880 = vmul.f32 %v1861, %v1872
        %v1881 = vmul.f32 %v1864, %v1873
        %1890 = vrot.lane.b32.xlu0 %v1874, 64
        %v1891 = vpop.permute.xlu0 %1890
        %1892 = vrot.lane.b32.xlu0 %v1875, 64
        %v1893 = vpop.permute.xlu0 %1892
        %1894 = vrot.lane.b32.xlu0 %v1876, 64
        %v1895 = vpop.permute.xlu0 %1894
        %1896 = vrot.lane.b32.xlu0 %v1877, 64
        %v1897 = vpop.permute.xlu0 %1896
        %1898 = vrot.lane.b32.xlu0 %v1878, 64
        %v1899 = vpop.permute.xlu0 %1898
        %1900 = vrot.lane.b32.xlu0 %v1879, 64
        %v1901 = vpop.permute.xlu0 %1900
        %1902 = vrot.lane.b32.xlu0 %v1880, 64
        %v1903 = vpop.permute.xlu0 %1902
        %1904 = vrot.lane.b32.xlu0 %v1881, 64
        %v1905 = vpop.permute.xlu0 %1904
        %vm1914 = vcmask 785920
        %1915 = vst.msk [vmem:[#allocation3] sm:$0xff] %vm1914, %v1891
        %1916 = vst.msk [vmem:[#allocation3 + $0x8] sm:$0xff] %vm1914, %v1893
        %1917 = vst.msk [vmem:[#allocation3 + $0x10] sm:$0xff] %vm1914, %v1895
        %1918 = vst.msk [vmem:[#allocation3 + $0x18] sm:$0xff] %vm1914, %v1897
        %1919 = vst.msk [vmem:[#allocation3 + $0x20] sm:$0xff] %vm1914, %v1899
        %1920 = vst.msk [vmem:[#allocation3 + $0x28] sm:$0xff] %vm1914, %v1901
        %1921 = vst.msk [vmem:[#allocation3 + $0x30] sm:$0xff] %vm1914, %v1903
        %1922 = vst.msk [vmem:[#allocation3 + $0x38] sm:$0xff] %vm1914, %v1905
        %v1923 = vld [vmem:[#allocation2] sm:$0xff]
        %v1924 = vld [vmem:[#allocation2 + $0x18] sm:$0xff]
        %v1925 = vld [vmem:[#allocation2 + $0x30] sm:$0xff]
        %v1926 = vld [vmem:[#allocation2 + $0x48] sm:$0xff]
        %v1927 = vld [vmem:[#allocation2 + $0x60] sm:$0xff]
        %v1928 = vld [vmem:[#allocation2 + $0x78] sm:$0xff]
        %v1929 = vld [vmem:[#allocation2 + $0x90] sm:$0xff]
        %v1930 = vld [vmem:[#allocation2 + $0xa8] sm:$0xff]
        %v1931 = vld [vmem:[#allocation2 + $0x8] sm:$0xff]
        %v1932 = vld [vmem:[#allocation2 + $0x20] sm:$0xff]
        %v1933 = vld [vmem:[#allocation2 + $0x38] sm:$0xff]
        %v1934 = vld [vmem:[#allocation2 + $0x50] sm:$0xff]
        %v1935 = vld [vmem:[#allocation2 + $0x68] sm:$0xff]
        %v1936 = vld [vmem:[#allocation2 + $0x80] sm:$0xff]
        %v1937 = vld [vmem:[#allocation2 + $0x98] sm:$0xff]
        %v1938 = vld [vmem:[#allocation2 + $0xb0] sm:$0xff]
        %1941 = vrot.lane.b32.xlu0 %v1923, 32
        %v1942 = vpop.permute.xlu0 %1941
        %1943 = vrot.lane.b32.xlu0 %v1924, 32
        %v1944 = vpop.permute.xlu0 %1943
        %1947 = vrot.lane.b32.xlu0 %v1931, 32
        %v1948 = vpop.permute.xlu0 %1947
        %1949 = vrot.lane.b32.xlu0 %v1932, 32
        %v1950 = vpop.permute.xlu0 %1949
        %v1951 = vsel %vm565, %v1942, 0
        %v1953 = vsel %vm565, %v1944, 0
        %v1955 = vsel %vm565, %v1948, 0
        %v1957 = vsel %vm565, %v1950, 0
        %1959 = vmatpush.xpose.msra.mxu0 0.0
        %1960 = vmatpush.xpose.msra.mxu0 0.0
        %1961 = vmatpush.xpose.msra.mxu0 0.0
        %1962 = vmatpush.xpose.msra.mxu0 0.0
        %1963 = vmatpush.xpose.msra.mxu0 0.0
        %1964 = vmatpush.xpose.msra.mxu0 0.0
        %1965 = vmatpush.xpose.msra.mxu0 0.0
        %1966 = vmatpush.xpose.msra.mxu0 0.0
        %1967 = vmatpush.xpose.msra.mxu0 0.0
        %1968 = vmatpush.xpose.msra.mxu0 0.0
        %1969 = vmatpush.xpose.msra.mxu0 0.0
        %1970 = vmatpush.xpose.msra.mxu0 0.0
        %1971 = vmatpush.xpose.msra.mxu0 0.0
        %1972 = vmatpush.xpose.msra.mxu0 0.0
        %1973 = vmatpush.xpose.msra.mxu0 %v1957
        %1974 = vmatpush.xpose.msra.mxu0 %v1955
        %1975 = vmatmul.f32.gmra.mxu0 %v1951
        %v1976 = vpop.f32.mrf.mxu0
        %v1977 = vadd.f32 0.0, %v1976
        %1978 = vmatmul.f32.gmra.mxu0 %v1953
        %v1979 = vpop.f32.mrf.mxu0
        %v1980 = vadd.f32 0.0, %v1979
        %1981 = vdwg.mxu0
        %1984 = vrot.lane.b32.xlu0 %v1925, 32
        %v1985 = vpop.permute.xlu0 %1984
        %1986 = vrot.lane.b32.xlu0 %v1926, 32
        %v1987 = vpop.permute.xlu0 %1986
        %1990 = vrot.lane.b32.xlu0 %v1933, 32
        %v1991 = vpop.permute.xlu0 %1990
        %1992 = vrot.lane.b32.xlu0 %v1934, 32
        %v1993 = vpop.permute.xlu0 %1992
        %v1994 = vsel %vm565, %v1985, 0
        %v1996 = vsel %vm565, %v1987, 0
        %v1998 = vsel %vm565, %v1991, 0
        %v2000 = vsel %vm565, %v1993, 0
        %2002 = vmatpush.xpose.msra.mxu0 0.0
        %2003 = vmatpush.xpose.msra.mxu0 0.0
        %2004 = vmatpush.xpose.msra.mxu0 0.0
        %2005 = vmatpush.xpose.msra.mxu0 0.0
        %2006 = vmatpush.xpose.msra.mxu0 0.0
        %2007 = vmatpush.xpose.msra.mxu0 0.0
        %2008 = vmatpush.xpose.msra.mxu0 0.0
        %2009 = vmatpush.xpose.msra.mxu0 0.0
        %2010 = vmatpush.xpose.msra.mxu0 0.0
        %2011 = vmatpush.xpose.msra.mxu0 0.0
        %2012 = vmatpush.xpose.msra.mxu0 0.0
        %2013 = vmatpush.xpose.msra.mxu0 0.0
        %2014 = vmatpush.xpose.msra.mxu0 0.0
        %2015 = vmatpush.xpose.msra.mxu0 0.0
        %2016 = vmatpush.xpose.msra.mxu0 %v2000
        %2017 = vmatpush.xpose.msra.mxu0 %v1998
        %2018 = vmatmul.f32.gmra.mxu0 %v1994
        %v2019 = vpop.f32.mrf.mxu0
        %v2020 = vadd.f32 0.0, %v2019
        %2021 = vmatmul.f32.gmra.mxu0 %v1996
        %v2022 = vpop.f32.mrf.mxu0
        %v2023 = vadd.f32 0.0, %v2022
        %2024 = vdwg.mxu0
        %2027 = vrot.lane.b32.xlu0 %v1927, 32
        %v2028 = vpop.permute.xlu0 %2027
        %2029 = vrot.lane.b32.xlu0 %v1928, 32
        %v2030 = vpop.permute.xlu0 %2029
        %2033 = vrot.lane.b32.xlu0 %v1935, 32
        %v2034 = vpop.permute.xlu0 %2033
        %2035 = vrot.lane.b32.xlu0 %v1936, 32
        %v2036 = vpop.permute.xlu0 %2035
        %v2037 = vsel %vm565, %v2028, 0
        %v2039 = vsel %vm565, %v2030, 0
        %v2041 = vsel %vm565, %v2034, 0
        %v2043 = vsel %vm565, %v2036, 0
        %2045 = vmatpush.xpose.msra.mxu0 0.0
        %2046 = vmatpush.xpose.msra.mxu0 0.0
        %2047 = vmatpush.xpose.msra.mxu0 0.0
        %2048 = vmatpush.xpose.msra.mxu0 0.0
        %2049 = vmatpush.xpose.msra.mxu0 0.0
        %2050 = vmatpush.xpose.msra.mxu0 0.0
        %2051 = vmatpush.xpose.msra.mxu0 0.0
        %2052 = vmatpush.xpose.msra.mxu0 0.0
        %2053 = vmatpush.xpose.msra.mxu0 0.0
        %2054 = vmatpush.xpose.msra.mxu0 0.0
        %2055 = vmatpush.xpose.msra.mxu0 0.0
        %2056 = vmatpush.xpose.msra.mxu0 0.0
        %2057 = vmatpush.xpose.msra.mxu0 0.0
        %2058 = vmatpush.xpose.msra.mxu0 0.0
        %2059 = vmatpush.xpose.msra.mxu0 %v2043
        %2060 = vmatpush.xpose.msra.mxu0 %v2041
        %2061 = vmatmul.f32.gmra.mxu0 %v2037
        %v2062 = vpop.f32.mrf.mxu0
        %v2063 = vadd.f32 0.0, %v2062
        %2064 = vmatmul.f32.gmra.mxu0 %v2039
        %v2065 = vpop.f32.mrf.mxu0
        %v2066 = vadd.f32 0.0, %v2065
        %2067 = vdwg.mxu0
        %2070 = vrot.lane.b32.xlu0 %v1929, 32
        %v2071 = vpop.permute.xlu0 %2070
        %2072 = vrot.lane.b32.xlu0 %v1930, 32
        %v2073 = vpop.permute.xlu0 %2072
        %2076 = vrot.lane.b32.xlu0 %v1937, 32
        %v2077 = vpop.permute.xlu0 %2076
        %2078 = vrot.lane.b32.xlu0 %v1938, 32
        %v2079 = vpop.permute.xlu0 %2078
        %v2080 = vsel %vm565, %v2071, 0
        %v2082 = vsel %vm565, %v2073, 0
        %v2084 = vsel %vm565, %v2077, 0
        %v2086 = vsel %vm565, %v2079, 0
        %2088 = vmatpush.xpose.msra.mxu0 0.0
        %2089 = vmatpush.xpose.msra.mxu0 0.0
        %2090 = vmatpush.xpose.msra.mxu0 0.0
        %2091 = vmatpush.xpose.msra.mxu0 0.0
        %2092 = vmatpush.xpose.msra.mxu0 0.0
        %2093 = vmatpush.xpose.msra.mxu0 0.0
        %2094 = vmatpush.xpose.msra.mxu0 0.0
        %2095 = vmatpush.xpose.msra.mxu0 0.0
        %2096 = vmatpush.xpose.msra.mxu0 0.0
        %2097 = vmatpush.xpose.msra.mxu0 0.0
        %2098 = vmatpush.xpose.msra.mxu0 0.0
        %2099 = vmatpush.xpose.msra.mxu0 0.0
        %2100 = vmatpush.xpose.msra.mxu0 0.0
        %2101 = vmatpush.xpose.msra.mxu0 0.0
        %2102 = vmatpush.xpose.msra.mxu0 %v2086
        %2103 = vmatpush.xpose.msra.mxu0 %v2084
        %2104 = vmatmul.f32.gmra.mxu0 %v2080
        %v2105 = vpop.f32.mrf.mxu0
        %v2106 = vadd.f32 0.0, %v2105
        %2107 = vmatmul.f32.gmra.mxu0 %v2082
        %v2108 = vpop.f32.mrf.mxu0
        %v2109 = vadd.f32 0.0, %v2108
        %2110 = vdwg.mxu0
        %s2111 = scalar_lea.vmem [#allocation10], 192
        %v2112 = vld [vmem:[%s2111] sm:$0xff]
        %v2113 = vld [vmem:[%s2111 + $0x8] sm:$0xff]
        %v2114 = vld [vmem:[%s2111 + $0x10] sm:$0xff]
        %v2115 = vld [vmem:[%s2111 + $0x18] sm:$0xff]
        %v2116 = vld [vmem:[%s2111 + $0x20] sm:$0xff]
        %v2117 = vld [vmem:[%s2111 + $0x28] sm:$0xff]
        %v2118 = vld [vmem:[%s2111 + $0x30] sm:$0xff]
        %v2119 = vld [vmem:[%s2111 + $0x38] sm:$0xff]
        %v2120 = vadd.f32 %v1977, %v2112
        %v2121 = vadd.f32 %v1980, %v2113
        %v2122 = vadd.f32 %v2020, %v2114
        %v2123 = vadd.f32 %v2023, %v2115
        %v2124 = vadd.f32 %v2063, %v2116
        %v2125 = vadd.f32 %v2066, %v2117
        %v2126 = vadd.f32 %v2106, %v2118
        %v2127 = vadd.f32 %v2109, %v2119
        %v2128 = vsel %vm722, %v2120, -inf
        %2129 = vmax.xlane.f32.xlu0 %v2128
        %v2130 = vpop.xlane.xlu0 %2129
        %v2131 = vsel %vm722, %v2121, -inf
        %2132 = vmax.xlane.f32.xlu0 %v2131
        %v2133 = vpop.xlane.xlu0 %2132
        %v2134 = vsel %vm722, %v2122, -inf
        %2135 = vmax.xlane.f32.xlu0 %v2134
        %v2136 = vpop.xlane.xlu0 %2135
        %v2137 = vsel %vm722, %v2123, -inf
        %2138 = vmax.xlane.f32.xlu0 %v2137
        %v2139 = vpop.xlane.xlu0 %2138
        %v2140 = vsel %vm722, %v2124, -inf
        %2141 = vmax.xlane.f32.xlu0 %v2140
        %v2142 = vpop.xlane.xlu0 %2141
        %v2143 = vsel %vm722, %v2125, -inf
        %2144 = vmax.xlane.f32.xlu0 %v2143
        %v2145 = vpop.xlane.xlu0 %2144
        %v2146 = vsel %vm722, %v2126, -inf
        %2147 = vmax.xlane.f32.xlu0 %v2146
        %v2148 = vpop.xlane.xlu0 %2147
        %v2149 = vsel %vm722, %v2127, -inf
        %2150 = vmax.xlane.f32.xlu0 %v2149
        %v2151 = vpop.xlane.xlu0 %2150
        %v2152 = vsub.f32 %v2120, %v2130
        %v2153 = vsub.f32 %v2121, %v2133
        %v2154 = vsub.f32 %v2122, %v2136
        %v2155 = vsub.f32 %v2123, %v2139
        %v2156 = vsub.f32 %v2124, %v2142
        %v2157 = vsub.f32 %v2125, %v2145
        %v2158 = vsub.f32 %v2126, %v2148
        %v2159 = vsub.f32 %v2127, %v2151
        %v2160 = vmul.f32 %v2152, 1.442695
        %v2161 = vpow.pop %v2160
        %v2162 = vmul.f32 %v2153, 1.442695
        %v2163 = vpow.pop %v2162
        %v2164 = vmul.f32 %v2154, 1.442695
        %v2165 = vpow.pop %v2164
        %v2166 = vmul.f32 %v2155, 1.442695
        %v2167 = vpow.pop %v2166
        %v2168 = vmul.f32 %v2156, 1.442695
        %v2169 = vpow.pop %v2168
        %v2170 = vmul.f32 %v2157, 1.442695
        %v2171 = vpow.pop %v2170
        %v2172 = vmul.f32 %v2158, 1.442695
        %v2173 = vpow.pop %v2172
        %v2174 = vmul.f32 %v2159, 1.442695
        %v2175 = vpow.pop %v2174
        %v2176 = vsel %vm722, %v2161, 0.0
        %2177 = vadd.xlane.f32.xlu0 %v2176
        %v2178 = vpop.xlane.xlu0 %2177
        %v2179 = vsel %vm722, %v2163, 0.0
        %2180 = vadd.xlane.f32.xlu0 %v2179
        %v2181 = vpop.xlane.xlu0 %2180
        %v2182 = vsel %vm722, %v2165, 0.0
        %2183 = vadd.xlane.f32.xlu0 %v2182
        %v2184 = vpop.xlane.xlu0 %2183
        %v2185 = vsel %vm722, %v2167, 0.0
        %2186 = vadd.xlane.f32.xlu0 %v2185
        %v2187 = vpop.xlane.xlu0 %2186
        %v2188 = vsel %vm722, %v2169, 0.0
        %2189 = vadd.xlane.f32.xlu0 %v2188
        %v2190 = vpop.xlane.xlu0 %2189
        %v2191 = vsel %vm722, %v2171, 0.0
        %2192 = vadd.xlane.f32.xlu0 %v2191
        %v2193 = vpop.xlane.xlu0 %2192
        %v2194 = vsel %vm722, %v2173, 0.0
        %2195 = vadd.xlane.f32.xlu0 %v2194
        %v2196 = vpop.xlane.xlu0 %2195
        %v2197 = vsel %vm722, %v2175, 0.0
        %2198 = vadd.xlane.f32.xlu0 %v2197
        %v2199 = vpop.xlane.xlu0 %2198
        %v2200 = vld [vmem:[#allocation2 + $0x10] sm:$0xff]
        %v2201 = vld [vmem:[#allocation2 + $0x28] sm:$0xff]
        %v2202 = vld [vmem:[#allocation2 + $0x40] sm:$0xff]
        %v2203 = vld [vmem:[#allocation2 + $0x58] sm:$0xff]
        %v2204 = vld [vmem:[#allocation2 + $0x70] sm:$0xff]
        %v2205 = vld [vmem:[#allocation2 + $0x88] sm:$0xff]
        %v2206 = vld [vmem:[#allocation2 + $0xa0] sm:$0xff]
        %v2207 = vld [vmem:[#allocation2 + $0xb8] sm:$0xff]
        %2210 = vrot.lane.b32.xlu0 %v2200, 32
        %v2211 = vpop.permute.xlu0 %2210
        %2212 = vrot.lane.b32.xlu0 %v2201, 32
        %v2213 = vpop.permute.xlu0 %2212
        %v2217 = vsel %vm722, %v2161, 0
        %v2220 = vsel %vm722, %v2163, 0
        %2222 = vmatpush.msra.mxu0 0.0
        %2223 = vmatpush.msra.mxu0 0.0
        %2224 = vmatpush.msra.mxu0 0.0
        %2225 = vmatpush.msra.mxu0 0.0
        %2226 = vmatpush.msra.mxu0 0.0
        %2227 = vmatpush.msra.mxu0 0.0
        %2228 = vmatpush.msra.mxu0 0.0
        %2229 = vmatpush.msra.mxu0 0.0
        %2230 = vmatpush.msra.mxu0 0.0
        %2231 = vmatpush.msra.mxu0 0.0
        %2232 = vmatpush.msra.mxu0 0.0
        %2233 = vmatpush.msra.mxu0 0.0
        %2234 = vmatpush.msra.mxu0 0.0
        %2235 = vmatpush.msra.mxu0 0.0
        %2236 = vmatpush.msra.mxu0 %v2213
        %2237 = vmatpush.msra.mxu0 %v2211
        %2238 = vmatmul.f32.gmra.mxu0 %v2217
        %v2239 = vpop.f32.mrf.mxu0
        %v2240 = vadd.f32 0.0, %v2239
        %2241 = vmatmul.f32.gmra.mxu0 %v2220
        %v2242 = vpop.f32.mrf.mxu0
        %v2243 = vadd.f32 0.0, %v2242
        %2244 = vdwg.mxu0
        %2247 = vrot.lane.b32.xlu0 %v2202, 32
        %v2248 = vpop.permute.xlu0 %2247
        %2249 = vrot.lane.b32.xlu0 %v2203, 32
        %v2250 = vpop.permute.xlu0 %2249
        %v2254 = vsel %vm722, %v2165, 0
        %v2257 = vsel %vm722, %v2167, 0
        %2259 = vmatpush.msra.mxu0 0.0
        %2260 = vmatpush.msra.mxu0 0.0
        %2261 = vmatpush.msra.mxu0 0.0
        %2262 = vmatpush.msra.mxu0 0.0
        %2263 = vmatpush.msra.mxu0 0.0
        %2264 = vmatpush.msra.mxu0 0.0
        %2265 = vmatpush.msra.mxu0 0.0
        %2266 = vmatpush.msra.mxu0 0.0
        %2267 = vmatpush.msra.mxu0 0.0
        %2268 = vmatpush.msra.mxu0 0.0
        %2269 = vmatpush.msra.mxu0 0.0
        %2270 = vmatpush.msra.mxu0 0.0
        %2271 = vmatpush.msra.mxu0 0.0
        %2272 = vmatpush.msra.mxu0 0.0
        %2273 = vmatpush.msra.mxu0 %v2250
        %2274 = vmatpush.msra.mxu0 %v2248
        %2275 = vmatmul.f32.gmra.mxu0 %v2254
        %v2276 = vpop.f32.mrf.mxu0
        %v2277 = vadd.f32 0.0, %v2276
        %2278 = vmatmul.f32.gmra.mxu0 %v2257
        %v2279 = vpop.f32.mrf.mxu0
        %v2280 = vadd.f32 0.0, %v2279
        %2281 = vdwg.mxu0
        %2284 = vrot.lane.b32.xlu0 %v2204, 32
        %v2285 = vpop.permute.xlu0 %2284
        %2286 = vrot.lane.b32.xlu0 %v2205, 32
        %v2287 = vpop.permute.xlu0 %2286
        %v2291 = vsel %vm722, %v2169, 0
        %v2294 = vsel %vm722, %v2171, 0
        %2296 = vmatpush.msra.mxu0 0.0
        %2297 = vmatpush.msra.mxu0 0.0
        %2298 = vmatpush.msra.mxu0 0.0
        %2299 = vmatpush.msra.mxu0 0.0
        %2300 = vmatpush.msra.mxu0 0.0
        %2301 = vmatpush.msra.mxu0 0.0
        %2302 = vmatpush.msra.mxu0 0.0
        %2303 = vmatpush.msra.mxu0 0.0
        %2304 = vmatpush.msra.mxu0 0.0
        %2305 = vmatpush.msra.mxu0 0.0
        %2306 = vmatpush.msra.mxu0 0.0
        %2307 = vmatpush.msra.mxu0 0.0
        %2308 = vmatpush.msra.mxu0 0.0
        %2309 = vmatpush.msra.mxu0 0.0
        %2310 = vmatpush.msra.mxu0 %v2287
        %2311 = vmatpush.msra.mxu0 %v2285
        %2312 = vmatmul.f32.gmra.mxu0 %v2291
        %v2313 = vpop.f32.mrf.mxu0
        %v2314 = vadd.f32 0.0, %v2313
        %2315 = vmatmul.f32.gmra.mxu0 %v2294
        %v2316 = vpop.f32.mrf.mxu0
        %v2317 = vadd.f32 0.0, %v2316
        %2318 = vdwg.mxu0
        %2321 = vrot.lane.b32.xlu0 %v2206, 32
        %v2322 = vpop.permute.xlu0 %2321
        %2323 = vrot.lane.b32.xlu0 %v2207, 32
        %v2324 = vpop.permute.xlu0 %2323
        %v2328 = vsel %vm722, %v2173, 0
        %v2331 = vsel %vm722, %v2175, 0
        %2333 = vmatpush.msra.mxu0 0.0
        %2334 = vmatpush.msra.mxu0 0.0
        %2335 = vmatpush.msra.mxu0 0.0
        %2336 = vmatpush.msra.mxu0 0.0
        %2337 = vmatpush.msra.mxu0 0.0
        %2338 = vmatpush.msra.mxu0 0.0
        %2339 = vmatpush.msra.mxu0 0.0
        %2340 = vmatpush.msra.mxu0 0.0
        %2341 = vmatpush.msra.mxu0 0.0
        %2342 = vmatpush.msra.mxu0 0.0
        %2343 = vmatpush.msra.mxu0 0.0
        %2344 = vmatpush.msra.mxu0 0.0
        %2345 = vmatpush.msra.mxu0 0.0
        %2346 = vmatpush.msra.mxu0 0.0
        %2347 = vmatpush.msra.mxu0 %v2324
        %2348 = vmatpush.msra.mxu0 %v2322
        %2349 = vmatmul.f32.gmra.mxu0 %v2328
        %v2350 = vpop.f32.mrf.mxu0
        %v2351 = vadd.f32 0.0, %v2350
        %2352 = vmatmul.f32.gmra.mxu0 %v2331
        %v2353 = vpop.f32.mrf.mxu0
        %v2354 = vadd.f32 0.0, %v2353
        %2355 = vdwg.mxu0
        %v2356 = vrcp.pop %v2178
        %v2357 = vrcp.pop %v2181
        %v2358 = vrcp.pop %v2184
        %v2359 = vrcp.pop %v2187
        %v2360 = vrcp.pop %v2190
        %v2361 = vrcp.pop %v2193
        %v2362 = vrcp.pop %v2196
        %v2363 = vrcp.pop %v2199
        %v2364 = vmul.f32 %v2240, %v2356
        %v2365 = vmul.f32 %v2243, %v2357
        %v2366 = vmul.f32 %v2277, %v2358
        %v2367 = vmul.f32 %v2280, %v2359
        %v2368 = vmul.f32 %v2314, %v2360
        %v2369 = vmul.f32 %v2317, %v2361
        %v2370 = vmul.f32 %v2351, %v2362
        %v2371 = vmul.f32 %v2354, %v2363
        %2380 = vrot.lane.b32.xlu0 %v2364, 96
        %v2381 = vpop.permute.xlu0 %2380
        %2382 = vrot.lane.b32.xlu0 %v2365, 96
        %v2383 = vpop.permute.xlu0 %2382
        %2384 = vrot.lane.b32.xlu0 %v2366, 96
        %v2385 = vpop.permute.xlu0 %2384
        %2386 = vrot.lane.b32.xlu0 %v2367, 96
        %v2387 = vpop.permute.xlu0 %2386
        %2388 = vrot.lane.b32.xlu0 %v2368, 96
        %v2389 = vpop.permute.xlu0 %2388
        %2390 = vrot.lane.b32.xlu0 %v2369, 96
        %v2391 = vpop.permute.xlu0 %2390
        %2392 = vrot.lane.b32.xlu0 %v2370, 96
        %v2393 = vpop.permute.xlu0 %2392
        %2394 = vrot.lane.b32.xlu0 %v2371, 96
        %v2395 = vpop.permute.xlu0 %2394
        %vm2404 = vcmask 1048320
        %2405 = vst.msk [vmem:[#allocation3] sm:$0xff] %vm2404, %v2381
        %2406 = vst.msk [vmem:[#allocation3 + $0x8] sm:$0xff] %vm2404, %v2383
        %2407 = vst.msk [vmem:[#allocation3 + $0x10] sm:$0xff] %vm2404, %v2385
        %2408 = vst.msk [vmem:[#allocation3 + $0x18] sm:$0xff] %vm2404, %v2387
        %2409 = vst.msk [vmem:[#allocation3 + $0x20] sm:$0xff] %vm2404, %v2389
        %2410 = vst.msk [vmem:[#allocation3 + $0x28] sm:$0xff] %vm2404, %v2391
        %2411 = vst.msk [vmem:[#allocation3 + $0x30] sm:$0xff] %vm2404, %v2393
        %2412 = vst.msk [vmem:[#allocation3 + $0x38] sm:$0xff] %vm2404, %v2395
        %v2413 = vld [vmem:[#allocation3] sm:$0xff]
        %v2414 = vld [vmem:[#allocation3 + $0x8] sm:$0xff]
        %v2415 = vld [vmem:[#allocation3 + $0x10] sm:$0xff]
        %v2416 = vld [vmem:[#allocation3 + $0x18] sm:$0xff]
        %v2417 = vld [vmem:[#allocation3 + $0x20] sm:$0xff]
        %v2418 = vld [vmem:[#allocation3 + $0x28] sm:$0xff]
        %v2419 = vld [vmem:[#allocation3 + $0x30] sm:$0xff]
        %v2420 = vld [vmem:[#allocation3 + $0x38] sm:$0xff]
        %v2421 = vld [vmem:[#allocation12] sm:$0xff]
        %v2422 = vld [vmem:[#allocation12 + $0x8] sm:$0xff]
        %v2423 = vld [vmem:[#allocation12 + $0x10] sm:$0xff]
        %v2424 = vld [vmem:[#allocation12 + $0x18] sm:$0xff]
        %v2425 = vld [vmem:[#allocation12 + $0x20] sm:$0xff]
        %v2426 = vld [vmem:[#allocation12 + $0x28] sm:$0xff]
        %v2427 = vld [vmem:[#allocation12 + $0x30] sm:$0xff]
        %v2428 = vld [vmem:[#allocation12 + $0x38] sm:$0xff]
        %v2429 = vld [vmem:[#allocation12 + $0x40] sm:$0xff]
        %v2430 = vld [vmem:[#allocation12 + $0x48] sm:$0xff]
        %v2431 = vld [vmem:[#allocation12 + $0x50] sm:$0xff]
        %v2432 = vld [vmem:[#allocation12 + $0x58] sm:$0xff]
        %v2433 = vld [vmem:[#allocation12 + $0x60] sm:$0xff]
        %v2434 = vld [vmem:[#allocation12 + $0x68] sm:$0xff]
        %v2435 = vld [vmem:[#allocation12 + $0x70] sm:$0xff]
        %v2436 = vld [vmem:[#allocation12 + $0x78] sm:$0xff]
        %v2437 = vld [vmem:[%s5] sm:$0x1]
        %v2439 = vperm.slane %v2437, 0
        %2441 = vmatpush.msra.mxu0 %v2436
        %2442 = vmatpush.msra.mxu0 %v2435
        %2443 = vmatpush.msra.mxu0 %v2434
        %2444 = vmatpush.msra.mxu0 %v2433
        %2445 = vmatpush.msra.mxu0 %v2432
        %2446 = vmatpush.msra.mxu0 %v2431
        %2447 = vmatpush.msra.mxu0 %v2430
        %2448 = vmatpush.msra.mxu0 %v2429
        %2449 = vmatpush.msra.mxu0 %v2428
        %2450 = vmatpush.msra.mxu0 %v2427
        %2451 = vmatpush.msra.mxu0 %v2426
        %2452 = vmatpush.msra.mxu0 %v2425
        %2453 = vmatpush.msra.mxu0 %v2424
        %2454 = vmatpush.msra.mxu0 %v2423
        %2455 = vmatpush.msra.mxu0 %v2422
        %2456 = vmatpush.msra.mxu0 %v2421
        %2457 = vmatmul.f32.gmra.mxu0 %v2413
        %v2458 = vpop.f32.mrf.mxu0
        %v2459 = vadd.f32 %v2439, %v2458
        %2460 = vmatmul.f32.gmra.mxu0 %v2414
        %v2461 = vpop.f32.mrf.mxu0
        %v2462 = vadd.f32 %v2439, %v2461
        %2463 = vmatmul.f32.gmra.mxu0 %v2415
        %v2464 = vpop.f32.mrf.mxu0
        %v2465 = vadd.f32 %v2439, %v2464
        %2466 = vmatmul.f32.gmra.mxu0 %v2416
        %v2467 = vpop.f32.mrf.mxu0
        %v2468 = vadd.f32 %v2439, %v2467
        %2469 = vmatmul.f32.gmra.mxu0 %v2417
        %v2470 = vpop.f32.mrf.mxu0
        %v2471 = vadd.f32 %v2439, %v2470
        %2472 = vmatmul.f32.gmra.mxu0 %v2418
        %v2473 = vpop.f32.mrf.mxu0
        %v2474 = vadd.f32 %v2439, %v2473
        %2475 = vmatmul.f32.gmra.mxu0 %v2419
        %v2476 = vpop.f32.mrf.mxu0
        %v2477 = vadd.f32 %v2439, %v2476
        %2478 = vmatmul.f32.gmra.mxu0 %v2420
        %v2479 = vpop.f32.mrf.mxu0
        %v2480 = vadd.f32 %v2439, %v2479
        %2481 = vdwg.mxu0
        %2482 = vst [vmem:[%s335] sm:$0xff] %v2459
        %2483 = vst [vmem:[%s335 + $0x8] sm:$0xff] %v2462
        %2484 = vst [vmem:[%s335 + $0x10] sm:$0xff] %v2465
        %2485 = vst [vmem:[%s335 + $0x18] sm:$0xff] %v2468
        %2486 = vst [vmem:[%s335 + $0x20] sm:$0xff] %v2471
        %2487 = vst [vmem:[%s335 + $0x28] sm:$0xff] %v2474
        %2488 = vst [vmem:[%s335 + $0x30] sm:$0xff] %v2477
        %2489 = vst [vmem:[%s335 + $0x38] sm:$0xff] %v2480
        %s2490 = sand.u32 %s164, 1
        %s2491 = scalar_lea.sflag [#allocation6], %s2490
        %s2492 = sand.u32 %s164, 1
        %s2493 = smul.addr %s2492, 64
        %s2494 = scalar_lea.vmem [#allocation13], %s2493
        // Predicated region
        $region65: #{tpu_custom_call.1} parent=43 // pred_check
          %p2495 = pneg %p174
        $region66: #{tpu_custom_call.1} parent=43 // pred_check_branch
          %2497 = sbr.rel (%p2495) target = $region68
        $region67: #{tpu_custom_call.1} parent=43 // pred_region
          %s2498 = smul.u32 8, %s25
          %2500 = vsyncadd %s2491, 0
          %s2501 = smul.addr %s2498, 8
          %s2502 = scalar_lea.hbm %s6, %s2501
          %s2503 = sshll.u32 %s2494, 4
          %s2504 = int_to_ptr.vmem [resolvable:$true] %s2503
          %s2505 = sshll.u32 %s2502, 4
          %s2506 = int_to_ptr.hbm [resolvable:$true] %s2505
          %2511 = dma.vmem_to_hbm [thread:$0]  %s2504, 1024, %s2506, %s2491, 128, 128, 8
        $region68: #{tpu_custom_call.1} parent=43 // pred_fallthru
          _
      $region44: #{tpu_custom_call.1} parent=5 // pred_fallthru
        _
      %p2512 = scmp.le.s32.totalorder 2, %s20
      // Predicated region
      $region69: #{tpu_custom_call.1} parent=5 // pred_check
        %p2513 = pneg %p2512
      $region70: #{tpu_custom_call.1} parent=5 // pred_check_branch
        %2515 = sbr.rel (%p2513) target = $region72
      $region71: #{tpu_custom_call.1} parent=5 // pred_region
        %s2516 = ssub.s32 %s20, 2
        // Predicated region
        $region73: #{tpu_custom_call.1} parent=71 // pred_check
          %p2517 = pneg %p180
        $region74: #{tpu_custom_call.1} parent=71 // pred_check_branch
          %2519 = sbr.rel (%p2517) target = $region76
        $region75: #{tpu_custom_call.1} parent=71 // pred_region
          %s2520 = sand.u32 %s165, 1
          %s2521 = scalar_lea.sflag [#allocation6], %s2520
          %s2522 = sand.u32 %s165, 1
          %s2523 = smul.addr %s2522, 64
          %s2524 = scalar_lea.vmem [#allocation13], %s2523
          %2526 = dma.done %s2521, 1024
        $region76: #{tpu_custom_call.1} parent=71 // pred_fallthru
          _
      $region72: #{tpu_custom_call.1} parent=5 // pred_fallthru
        _
    $region6: #{tpu_custom_call.1} parent=1 // loop_footer
      %s24 = sadd.s32 1, %s20
    $region7: #{tpu_custom_call.1} parent=1 // loop_footer_branch
      %19 = sbr.rel target = $region3
    $region8: #{tpu_custom_call.1} parent=1 // loop_exit
      _
    %2527 = vsyncpa [#allocation5], 1
    %s2528 = scalar_lea.sflag [#allocation5], 1
    %2529 = vsyncpa %s2528, 1
    %2530 = vsyncpa [#allocation8], 1
    %2531 = vsyncpa [#allocation11], 1
    %2532 = vsyncpa [#allocation6], 1
    %s2533 = scalar_lea.sflag [#allocation6], 1
    %2534 = vsyncpa %s2533, 1

</llo_original>
